<compile_context>
chip_gen: v7x
topology: tpu7x:2x2x1
jax: 0.10.0
libtpu: 0.0.40
codegen_flags: <defaults>
</compile_context>

<pallas_src>
import functools

import jax
import jax.numpy as jnp
from jax import lax
from jax.experimental import pallas as pl
from jax.experimental.pallas import tpu as pltpu


def _round_up(x, m):
    return ((x + m - 1) // m) * m


def _pick_chunk(tile):
    """Largest lane-chunk <= 512 that evenly divides the tile (tile % 128 == 0 always)."""
    for c in (512, 384, 256, 128):
        if tile % c == 0:
            return c
    return tile


# ----------------------------- Pallas kernel --------------------------------

def _fused_head_kernel(x_ref, wt_ref, b_ref, psm_ref, rm_ref, *,
                       n_cls, n_reg, reg_off, chunk, n_chunks):
    """One (batch, spatial-tile) step of the fused 1x1-conv heads.

    x_ref:   (1, C_in, T)   NCHW-native activation tile (spatial points on the lane axis)
    wt_ref:  (C_pad, C_in)  fused, transposed head weights [cls | pad | reg | pad]
    b_ref:   (C_pad, 1)     fused biases
    psm_ref: (1, n_cls, T)  classification head output tile
    rm_ref:  (1, n_reg, T)  regression head output tile
    """
    wt = wt_ref[...]        # weight-stationary, tiny (C_pad x C_in)
    bias = b_ref[...]

    def body(ci, carry):
        off = pl.multiple_of(ci * chunk, chunk)
        x_c = x_ref[0, :, pl.ds(off, chunk)]                           # (C_in, chunk)
        acc = jnp.dot(wt, x_c, preferred_element_type=jnp.float32,
                      precision=lax.Precision.HIGHEST)                 # (C_pad, chunk)
        out = acc + bias
        # Head offsets are 8-sublane aligned, so these row slices need no relayout;
        # output last dim stays lane-dense (unmasked vst).
        psm_ref[0, :, pl.ds(off, chunk)] = out[:n_cls, :].astype(psm_ref.dtype)
        rm_ref[0, :, pl.ds(off, chunk)] = (
            out[reg_off:reg_off + n_reg, :].astype(rm_ref.dtype))
        return carry

    lax.fori_loop(0, n_chunks, body, 0, unroll=True)


def fused_heads(x, wt_fused, b_fused, n_cls, n_reg, reg_off, *, tile_hw=4096):
    """x: (B, C_in, HW) f32, NCHW-native with H*W merged.

    wt_fused: (C_pad, C_in) fused transposed weights, b_fused: (C_pad, 1) fused biases.
    Returns (psm, rm) with shapes (B, n_cls, HW) and (B, n_reg, HW).
    """
    b, c_in, hw = x.shape
    c_pad = wt_fused.shape[0]

    # Lane-dense spatial tile; clamp to the (128-rounded) spatial extent so small feature
    # maps become a single block per batch element. Partial last tile is handled by the
    # BlockSpec pipeline (no jnp.pad, no post-kernel slice).
    tile = min(_round_up(tile_hw, 128), _round_up(hw, 128))
    chunk = _pick_chunk(tile)
    n_chunks = tile // chunk
    assert c_in % 8 == 0 and tile % 128 == 0 and c_pad % 8 == 0

    grid = (b, pl.cdiv(hw, tile))
    kernel = functools.partial(
        _fused_head_kernel, n_cls=n_cls, n_reg=n_reg, reg_off=reg_off,
        chunk=chunk, n_chunks=n_chunks)

    cost = pl.CostEstimate(
        flops=2 * b * hw * c_in * c_pad,
        transcendentals=0,
        bytes_accessed=4 * (x.size + wt_fused.size + b_fused.size
                            + b * hw * (n_cls + n_reg)),
    )

    return pl.pallas_call(
        kernel,
        out_shape=(jax.ShapeDtypeStruct((b, n_cls, hw), jnp.float32),
                   jax.ShapeDtypeStruct((b, n_reg, hw), jnp.float32)),
        grid_spec=pltpu.PrefetchScalarGridSpec(
            num_scalar_prefetch=0,
            grid=grid,
            in_specs=[
                pl.BlockSpec((1, c_in, tile), lambda bi, j: (bi, 0, j)),
                pl.BlockSpec((c_pad, c_in), lambda bi, j: (0, 0)),   # weight-stationary
                pl.BlockSpec((c_pad, 1), lambda bi, j: (0, 0)),
            ],
            out_specs=[
                pl.BlockSpec((1, n_cls, tile), lambda bi, j: (bi, 0, j)),
                pl.BlockSpec((1, n_reg, tile), lambda bi, j: (bi, 0, j)),
            ],
        ),
        compiler_params=pltpu.CompilerParams(
            dimension_semantics=("parallel", "parallel"),
            vmem_limit_bytes=32 * 1024 * 1024),
        cost_estimate=cost,
    )(x, wt_fused, b_fused)


# --------------------------- Module-level wrapper ----------------------------

class PointPillarIntermediateFFNetV3Heads:
    """Deterministic-parameter JAX/Pallas version of the detection heads."""

    def __init__(self, anchor_number=2, anchor_num=2, c_in=128 * 3, seed=0, tile_hw=4096):
        self.c_in = c_in
        self.n_cls = anchor_number            # cls_head out channels
        self.n_reg = 7 * anchor_num           # reg_head out channels
        self.tile_hw = tile_hw
        # 8-sublane-aligned head offsets inside the fused weight matrix.
        self.reg_off = _round_up(self.n_cls, 8)
        self.c_pad = self.reg_off + _round_up(self.n_reg, 8)

        key = jax.random.PRNGKey(seed)
        k_wc, k_bc, k_wr, k_br = jax.random.split(key, 4)
        scale = 1.0 / jnp.sqrt(jnp.float32(c_in))
        # Matmul form (C_out, C_in) — equivalent to PyTorch conv weight (C_out, C_in, 1, 1).
        w_cls = jax.random.uniform(k_wc, (self.n_cls, c_in), jnp.float32, -scale, scale)
        b_cls = jax.random.uniform(k_bc, (self.n_cls,), jnp.float32, -scale, scale)
        w_reg = jax.random.uniform(k_wr, (self.n_reg, c_in), jnp.float32, -scale, scale)
        b_reg = jax.random.uniform(k_br, (self.n_reg,), jnp.float32, -scale, scale)

        wt = jnp.zeros((self.c_pad, c_in), jnp.float32)
        wt = wt.at[: self.n_cls].set(w_cls)
        wt = wt.at[self.reg_off: self.reg_off + self.n_reg].set(w_reg)
        bf = jnp.zeros((self.c_pad, 1), jnp.float32)
        bf = bf.at[: self.n_cls, 0].set(b_cls)
        bf = bf.at[self.reg_off: self.reg_off + self.n_reg, 0].set(b_reg)
        self.wt_fused = wt
        self.b_fused = bf
        # Keep unfused copies for the reference check.
        self._w_cls, self._b_cls, self._w_reg, self._b_reg = w_cls, b_cls, w_reg, b_reg

    @functools.partial(jax.jit, static_argnums=0)
    def __call__(self, spatial_features_2d):
        """spatial_features_2d: NCHW float32 [B, 384, H, W] (as produced by the backbone)."""
        b, c, h, w = spatial_features_2d.shape
        assert c == self.c_in
        hw = h * w
        # NCHW-native: just merge H,W — no transpose, no pad, no extra HBM pass.
        x = spatial_features_2d.reshape(b, c, hw)

        psm, rm = fused_heads(x, self.wt_fused, self.b_fused,
                              self.n_cls, self.n_reg, self.reg_off,
                              tile_hw=self.tile_hw)

        psm = psm.reshape(b, self.n_cls, h, w)   # already NCHW, exact HW extent
        rm = rm.reshape(b, self.n_reg, h, w)
        simi_loss = jnp.zeros((1,), jnp.float32)
        return {"psm": psm, "rm": rm, "similarity_loss": simi_loss}

    def reference(self, spatial_features_2d):
        """Plain-JAX reference of the two 1x1 convs (for correctness check)."""
        psm = jnp.einsum("bchw,oc->bohw", spatial_features_2d, self._w_cls,
                         precision=lax.Precision.HIGHEST) \
            + self._b_cls[None, :, None, None]
        rm = jnp.einsum("bchw,oc->bohw", spatial_features_2d, self._w_reg,
                        precision=lax.Precision.HIGHEST) \
            + self._b_reg[None, :, None, None]
        return psm, rm


# ---------------------------------- main -------------------------------------

if __name__ == "__main__":
    key = jax.random.PRNGKey(0)
    B, C, H, W = 2, 128 * 3, 8, 8          # small spatial_features_2d consistent with 128*3 channels
    anchor_number, anchor_num = 2, 2

    x = jax.random.normal(key, (B, C, H, W), jnp.float32)

    model = PointPillarIntermediateFFNetV3Heads(
        anchor_number=anchor_number, anchor_num=anchor_num, c_in=C, seed=0)

    out = model(x)
    jax.block_until_ready(out)

    # sanity: compare Pallas kernel against a plain-JAX reference
    psm_ref, rm_ref = model.reference(x)
    assert out["psm"].shape == (B, anchor_number, H, W)
    assert out["rm"].shape == (B, 7 * anchor_num, H, W)
    assert out["similarity_loss"].shape == (1,)
    assert jnp.allclose(out["psm"], psm_ref, atol=1e-4, rtol=1e-4)
    assert jnp.allclose(out["rm"], rm_ref, atol=1e-4, rtol=1e-4)

    print("KERNEL_OK")
</pallas_src>

<mosaic_0001>
module attributes {stable_mosaic.version = 11 : i64} {
  func.func @_fused_head_kernel(%arg0: i32, %arg1: i32, %arg2: memref<1x384x128xf32, #tpu.memory_space<vmem>>, %arg3: memref<24x384xf32, #tpu.memory_space<vmem>>, %arg4: memref<24x1xf32, #tpu.memory_space<vmem>>, %arg5: memref<1x2x128xf32, #tpu.memory_space<vmem>>, %arg6: memref<1x14x128xf32, #tpu.memory_space<vmem>>) attributes {dimension_semantics = [#tpu.dimension_semantics<parallel>, #tpu.dimension_semantics<parallel>], iteration_bounds = array<i64: 2, 1>, scalar_prefetch = 0 : i64, scratch_operands = 0 : i64, tpu.core_type = #tpu.core_type<tc>, window_params = [{transform_indices = @transform_0, window_bounds = array<i64: 1, 384, 128>}, {pipeline_mode = #tpu.pipeline_mode<synchronous>, transform_indices = @transform_1, window_bounds = array<i64: 24, 384>}, {pipeline_mode = #tpu.pipeline_mode<synchronous>, transform_indices = @transform_2, window_bounds = array<i64: 24, 1>}, {transform_indices = @transform_3, window_bounds = array<i64: 1, 2, 128>}, {transform_indices = @transform_4, window_bounds = array<i64: 1, 14, 128>}]} {
    %c0 = arith.constant 0 : index
    %c0_0 = arith.constant 0 : index
    %0 = vector.load %arg3[%c0, %c0_0] : memref<24x384xf32, #tpu.memory_space<vmem>>, vector<24x384xf32>
    %c0_1 = arith.constant 0 : index
    %c0_2 = arith.constant 0 : index
    %1 = vector.load %arg4[%c0_1, %c0_2] : memref<24x1xf32, #tpu.memory_space<vmem>>, vector<24x1xf32>
    %c0_i32 = arith.constant 0 : i32
    %c128_i32 = arith.constant 128 : i32
    %2 = arith.muli %c0_i32, %c128_i32 : i32
    %3 = tpu.assume_multiple %2, 128 : i32
    %c0_3 = arith.constant 0 : index
    %c0_4 = arith.constant 0 : index
    %4 = arith.index_cast %3 : i32 to index
    %5 = vector.load %arg2[%c0_3, %c0_4, %4] : memref<1x384x128xf32, #tpu.memory_space<vmem>>, vector<1x384x128xf32>
    %6 = vector.shape_cast %5 : vector<1x384x128xf32> to vector<384x128xf32>
    %cst = arith.constant dense<0.000000e+00> : vector<24x128xf32>
    %7 = tpu.matmul %0, %6, %cst {dimension_numbers = #tpu.dot_dimension_numbers<[1], [0], [0], [1], [0, 0, 1, 1], [], []>, precision = #tpu.contract_precision<fp32>} : vector<24x384xf32>, vector<384x128xf32>, vector<24x128xf32> -> vector<24x128xf32>
    %8 = vector.broadcast %1 : vector<24x1xf32> to vector<24x128xf32>
    %9 = arith.addf %7, %8 : vector<24x128xf32>
    %10 = vector.extract_strided_slice %9 {offsets = [0, 0], sizes = [2, 128], strides = [1, 1]} : vector<24x128xf32> to vector<2x128xf32>
    %c0_5 = arith.constant 0 : index
    %c0_6 = arith.constant 0 : index
    %11 = arith.index_cast %3 : i32 to index
    %12 = vector.load %arg5[%c0_5, %c0_6, %11] : memref<1x2x128xf32, #tpu.memory_space<vmem>>, vector<1x2x128xf32>
    %13 = vector.shape_cast %12 : vector<1x2x128xf32> to vector<2x128xf32>
    %14 = vector.shape_cast %10 : vector<2x128xf32> to vector<1x2x128xf32>
    tpu.vector_store %arg5[%c0_5, %c0_6, %11], %14 {strides = array<i32>} : memref<1x2x128xf32, #tpu.memory_space<vmem>>, vector<1x2x128xf32>,
    %15 = vector.extract_strided_slice %9 {offsets = [8, 0], sizes = [14, 128], strides = [1, 1]} : vector<24x128xf32> to vector<14x128xf32>
    %c0_7 = arith.constant 0 : index
    %c0_8 = arith.constant 0 : index
    %16 = arith.index_cast %3 : i32 to index
    %17 = vector.load %arg6[%c0_7, %c0_8, %16] : memref<1x14x128xf32, #tpu.memory_space<vmem>>, vector<1x14x128xf32>
    %18 = vector.shape_cast %17 : vector<1x14x128xf32> to vector<14x128xf32>
    %19 = vector.shape_cast %15 : vector<14x128xf32> to vector<1x14x128xf32>
    tpu.vector_store %arg6[%c0_7, %c0_8, %16], %19 {strides = array<i32>} : memref<1x14x128xf32, #tpu.memory_space<vmem>>, vector<1x14x128xf32>,
    %c1_i32 = arith.constant 1 : i32
    return
  }
  func.func @transform_0(%arg0: i32, %arg1: i32) -> (i32, i32, i32) {
    %c0_i32 = arith.constant 0 : i32
    %c0_i32_0 = arith.constant 0 : i32
    return %arg0, %c0_i32, %arg1 : i32, i32, i32
  }
  func.func @transform_1(%arg0: i32, %arg1: i32) -> (i32, i32) {
    %c0_i32 = arith.constant 0 : i32
    %c0_i32_0 = arith.constant 0 : i32
    %c0_i32_1 = arith.constant 0 : i32
    return %c0_i32, %c0_i32_0 : i32, i32
  }
  func.func @transform_2(%arg0: i32, %arg1: i32) -> (i32, i32) {
    %c0_i32 = arith.constant 0 : i32
    %c0_i32_0 = arith.constant 0 : i32
    %c0_i32_1 = arith.constant 0 : i32
    return %c0_i32, %c0_i32_0 : i32, i32
  }
  func.func @transform_3(%arg0: i32, %arg1: i32) -> (i32, i32, i32) {
    %c0_i32 = arith.constant 0 : i32
    %c0_i32_0 = arith.constant 0 : i32
    return %arg0, %c0_i32, %arg1 : i32, i32, i32
  }
  func.func @transform_4(%arg0: i32, %arg1: i32) -> (i32, i32, i32) {
    %c0_i32 = arith.constant 0 : i32
    %c0_i32_0 = arith.constant 0 : i32
    return %arg0, %c0_i32, %arg1 : i32, i32, i32
  }
}

</mosaic_0001>

<llo_original>
// kernel: a_call__.1
$region0: #{a_call__.1}
  #allocation0 [shape = 'u32[]', space=smem, size = 0x4, offset = 0x4, fixed_abs, tag = 'smem constant byte address 0x4 - core index']
  #allocation1 [shape = 'u32[144,128]{1,0:T(1,128)}', space=vmem, size = 0x12000, scoped, tag = 'internal scratch']
  %s0 = inlined_call_operand.vmem [shape: f32[2,384,64], index: 0, kind: input, shape index: {}]
  %s1 = inlined_call_operand.vmem [shape: f32[24,384], index: 1, kind: input, shape index: {}]
  %s2 = inlined_call_operand.vmem [shape: f32[24,1], index: 2, kind: input, shape index: {}]
  %s3 = inlined_call_operand.vmem [shape: f32[2,2,64], index: 3, kind: output, shape index: {0}]
  %s4 = inlined_call_operand.vmem [shape: f32[2,14,64], index: 4, kind: output, shape index: {1}]
  %5 = xla_tuple %s3, %s4
  %s6 = sld [smem:[#allocation0]]
  $region53: #{a_call__.1} parent=0
    _
  %s8 = ssub.s32 1, %s6
  %s9 = scalar_select 0, %s8, %s6
  loop: start=0, step=1, limit=4
  $region2: #{a_call__.1} parent=0 // loop_pre_header
    _
  $region3: #{a_call__.1} parent=0 // loop_header
    %s11 = sphi 0, %s15
    %p12 = scmp.ge.s32.totalorder %s11, 4
    %s18 = sphi 0, %s30
    %s19 = sphi 0, %s26
    %s20 = sphi 0, %s18
    %s21 = sphi 0, %s19
    %s22 = sphi 0, %s20
    %s23 = sphi 0, %s21
    %s35 = sphi 0, %s37
    %s38 = sphi 0, %s35
    %s39 = sphi 0, %s38
    %s55 = sphi 0, %s39
    %s59 = sphi 0, %s59
    %s61 = sphi 0, %s59
    %s62 = sphi 0, %s61
    %s76 = sphi 0, %s62
    %s80 = sphi 0, %s80
    %s82 = sphi 0, %s80
    %s83 = sphi 0, %s82
    %s97 = sphi 0, %s83
    %s105 = sphi 0, %s107
    %s108 = sphi 0, %s105
    %s109 = sphi 0, %s108
    %s125 = sphi 0, %s109
    %s133 = sphi 0, %s135
    %s136 = sphi 0, %s133
    %s137 = sphi 0, %s136
    %s153 = sphi 0, %s137
  $region4: #{a_call__.1} parent=0 // loop_header_branch
    %14 = sbr.rel (%p12) target = $region8
  $region5: #{a_call__.1} parent=0 // loop_body
    %s16 = ssub.s32 %s11, 1
    %s17 = ssub.s32 %s11, 2
    %s24 = sadd.s32 1, %s19
    %p25 = scmp.ge.s32.totalorder %s24, 1
    %s26 = scalar_select %p25, 0, %s24
    %s27 = sadd.s32 1, %s18
    %s28 = scalar_select %p25, %s27, %s18
    %p29 = scmp.ge.s32.totalorder %s28, 2
    %s30 = scalar_select %p29, 0, %s28
    %s31 = ssub.s32 %s18, %s30
    %s32 = ssub.s32 %s19, %s26
    %s33 = sor.u32 %s31, %s32
    %p34 = scmp.eq.s32.totalorder %s33, 0
    %s36 = sadd.s32 %s35, 1
    %s37 = scalar_select %p34, %s35, %s36
    %p40 = pneg %p34
    %p41 = scmp.eq.s32.totalorder %s11, 1
    %p42 = por %p40, %p41
    %p43 = scmp.ne.s32.totalorder %s35, %s38
    %p44 = scmp.eq.s32.totalorder %s11, 0
    %p45 = por %p43, %p44
    %p46 = scmp.ne.s32.totalorder %s35, %s38
    %p47 = scmp.eq.s32.totalorder %s16, 1
    %p48 = por %p46, %p47
    %p49 = scmp.ne.s32.totalorder %s38, %s39
    %p50 = scmp.eq.s32.totalorder %s16, 0
    %p51 = por %p49, %p50
    %p52 = scmp.ne.s32.totalorder %s38, %s39
    %p53 = scmp.eq.s32.totalorder %s17, 1
    %p54 = por %p52, %p53
    %p56 = scmp.ne.s32.totalorder %s39, %s55
    %p57 = scmp.eq.s32.totalorder %s17, 0
    %p58 = por %p56, %p57
    %s60 = sadd.s32 %s59, 1
    %p63 = scmp.eq.s32.totalorder %s11, 1
    %p64 = scmp.ne.s32.totalorder %s59, %s61
    %p65 = scmp.eq.s32.totalorder %s11, 0
    %p66 = por %p64, %p65
    %p67 = scmp.ne.s32.totalorder %s59, %s61
    %p68 = scmp.eq.s32.totalorder %s16, 1
    %p69 = por %p67, %p68
    %p70 = scmp.ne.s32.totalorder %s61, %s62
    %p71 = scmp.eq.s32.totalorder %s16, 0
    %p72 = por %p70, %p71
    %p73 = scmp.ne.s32.totalorder %s61, %s62
    %p74 = scmp.eq.s32.totalorder %s17, 1
    %p75 = por %p73, %p74
    %p77 = scmp.ne.s32.totalorder %s62, %s76
    %p78 = scmp.eq.s32.totalorder %s17, 0
    %p79 = por %p77, %p78
    %s81 = sadd.s32 %s80, 1
    %p84 = scmp.eq.s32.totalorder %s11, 1
    %p85 = scmp.ne.s32.totalorder %s80, %s82
    %p86 = scmp.eq.s32.totalorder %s11, 0
    %p87 = por %p85, %p86
    %p88 = scmp.ne.s32.totalorder %s80, %s82
    %p89 = scmp.eq.s32.totalorder %s16, 1
    %p90 = por %p88, %p89
    %p91 = scmp.ne.s32.totalorder %s82, %s83
    %p92 = scmp.eq.s32.totalorder %s16, 0
    %p93 = por %p91, %p92
    %p94 = scmp.ne.s32.totalorder %s82, %s83
    %p95 = scmp.eq.s32.totalorder %s17, 1
    %p96 = por %p94, %p95
    %p98 = scmp.ne.s32.totalorder %s83, %s97
    %p99 = scmp.eq.s32.totalorder %s17, 0
    %p100 = por %p98, %p99
    %s101 = ssub.s32 %s18, %s30
    %s102 = ssub.s32 %s19, %s26
    %s103 = sor.u32 %s101, %s102
    %p104 = scmp.eq.s32.totalorder %s103, 0
    %s106 = sadd.s32 %s105, 1
    %s107 = scalar_select %p104, %s105, %s106
    %p110 = pneg %p104
    %p111 = scmp.eq.s32.totalorder %s11, 1
    %p112 = por %p110, %p111
    %p113 = scmp.ne.s32.totalorder %s105, %s108
    %p114 = scmp.eq.s32.totalorder %s11, 0
    %p115 = por %p113, %p114
    %p116 = scmp.ne.s32.totalorder %s105, %s108
    %p117 = scmp.eq.s32.totalorder %s16, 1
    %p118 = por %p116, %p117
    %p119 = scmp.ne.s32.totalorder %s108, %s109
    %p120 = scmp.eq.s32.totalorder %s16, 0
    %p121 = por %p119, %p120
    %p122 = scmp.ne.s32.totalorder %s108, %s109
    %p123 = scmp.eq.s32.totalorder %s17, 1
    %p124 = por %p122, %p123
    %p126 = scmp.ne.s32.totalorder %s109, %s125
    %p127 = scmp.eq.s32.totalorder %s17, 0
    %p128 = por %p126, %p127
    %s129 = ssub.s32 %s18, %s30
    %s130 = ssub.s32 %s19, %s26
    %s131 = sor.u32 %s129, %s130
    %p132 = scmp.eq.s32.totalorder %s131, 0
    %s134 = sadd.s32 %s133, 1
    %s135 = scalar_select %p132, %s133, %s134
    %p138 = pneg %p132
    %p139 = scmp.eq.s32.totalorder %s11, 1
    %p140 = por %p138, %p139
    %p141 = scmp.ne.s32.totalorder %s133, %s136
    %p142 = scmp.eq.s32.totalorder %s11, 0
    %p143 = por %p141, %p142
    %p144 = scmp.ne.s32.totalorder %s133, %s136
    %p145 = scmp.eq.s32.totalorder %s16, 1
    %p146 = por %p144, %p145
    %p147 = scmp.ne.s32.totalorder %s136, %s137
    %p148 = scmp.eq.s32.totalorder %s16, 0
    %p149 = por %p147, %p148
    %p150 = scmp.ne.s32.totalorder %s136, %s137
    %p151 = scmp.eq.s32.totalorder %s17, 1
    %p152 = por %p150, %p151
    %p154 = scmp.ne.s32.totalorder %s137, %s153
    %p155 = scmp.eq.s32.totalorder %s17, 0
    %p156 = por %p154, %p155
    %p157 = scmp.le.s32.totalorder 1, %s11
    %p158 = scmp.lt.s32.totalorder %s11, 3
    %p159 = pnand %p157, %p158
    %p160 = pneg %p159
    // Predicated region
    $region9: #{a_call__.1} parent=5 // pred_check
      _
    $region10: #{a_call__.1} parent=5 // pred_check_branch
      %162 = sbr.rel (%p159) target = $region12
    $region11: #{a_call__.1} parent=5 // pred_region
      %s163 = ssub.s32 %s11, 1
      // Predicated region
      $region13: #{a_call__.1} parent=11 // pred_check
        %p164 = pneg %p72
      $region14: #{a_call__.1} parent=11 // pred_check_branch
        %166 = sbr.rel (%p164) target = $region16
      $region15: #{a_call__.1} parent=11 // pred_region
        _
      $region16: #{a_call__.1} parent=11 // pred_fallthru
        _
      // Predicated region
      $region17: #{a_call__.1} parent=11 // pred_check
        %p167 = pneg %p93
      $region18: #{a_call__.1} parent=11 // pred_check_branch
        %169 = sbr.rel (%p167) target = $region20
      $region19: #{a_call__.1} parent=11 // pred_region
        _
      $region20: #{a_call__.1} parent=11 // pred_fallthru
        _
    $region12: #{a_call__.1} parent=5 // pred_fallthru
      _
    %p170 = scmp.lt.s32.totalorder %s11, 2
    // Predicated region
    $region21: #{a_call__.1} parent=5 // pred_check
      %p171 = pneg %p170
    $region22: #{a_call__.1} parent=5 // pred_check_branch
      %173 = sbr.rel (%p171) target = $region24
    $region23: #{a_call__.1} parent=5 // pred_region
      // Predicated region
      $region25: #{a_call__.1} parent=23 // pred_check
        %p174 = pneg %p45
      $region26: #{a_call__.1} parent=23 // pred_check_branch
        %176 = sbr.rel (%p174) target = $region28
      $region27: #{a_call__.1} parent=23 // pred_region
        %p177 = scmp.lt.s32.totalorder %s18, 1
        %s178 = scalar_select %p177, %s18, 1
        %p179 = scmp.lt.s32.totalorder %s19, 0
        %s180 = scalar_select %p179, %s19, 0
        %s181 = smul.addr %s178, 48
        %s182 = sadd.s32 %s180, %s181
        %s183 = smul.addr %s182, 8
        %s184 = scalar_lea.vmem %s0, %s183
      $region28: #{a_call__.1} parent=23 // pred_fallthru
        _
    $region24: #{a_call__.1} parent=5 // pred_fallthru
      _
    %p185 = scmp.le.s32.totalorder 1, %s11
    %p186 = scmp.lt.s32.totalorder %s11, 3
    %p187 = pnand %p185, %p186
    %p188 = pneg %p187
    // Predicated region
    $region29: #{a_call__.1} parent=5 // pred_check
      _
    $region30: #{a_call__.1} parent=5 // pred_check_branch
      %190 = sbr.rel (%p187) target = $region32
    $region31: #{a_call__.1} parent=5 // pred_region
      %s191 = ssub.s32 %s11, 1
      %p192 = scmp.lt.s32.totalorder %s20, 1
      %s193 = scalar_select %p192, %s20, 1
      %p194 = scmp.lt.s32.totalorder %s21, 0
      %s195 = scalar_select %p194, %s21, 0
      %s196 = smul.addr %s193, 48
      %s197 = sadd.s32 %s195, %s196
      %s198 = smul.addr %s197, 8
      %s199 = scalar_lea.vmem %s0, %s198
      %p200 = pneg %p51
      %p201 = pneg %p48
      %p202 = pneg %p72
      %p203 = pneg %p69
      %p204 = pneg %p93
      %p205 = pneg %p90
      %p206 = pneg %p121
      %p207 = pneg %p118
      %p208 = scmp.lt.s32.totalorder %s20, 1
      %s209 = scalar_select %p208, %s20, 1
      %p210 = scmp.lt.s32.totalorder %s21, 0
      %s211 = scalar_select %p210, %s21, 0
      %s212 = sadd.s32 %s211, %s209
      %s213 = smul.addr %s212, 2
      %s214 = scalar_lea.vmem %s3, %s213
      %p215 = pneg %p149
      %p216 = pneg %p146
      %p217 = scmp.lt.s32.totalorder %s20, 1
      %s218 = scalar_select %p217, %s20, 1
      %p219 = scmp.lt.s32.totalorder %s21, 0
      %s220 = scalar_select %p219, %s21, 0
      %s221 = smul.addr %s218, 2
      %s222 = sadd.s32 %s220, %s221
      %s223 = smul.addr %s222, 8
      %s224 = scalar_lea.vmem %s4, %s223
      %p225 = scmp.lt.s32.totalorder %s20, 1
      %s226 = scalar_select %p225, %s20, 1
      %p227 = scmp.lt.s32.totalorder %s21, 0
      %s228 = scalar_select %p227, %s21, 0
      %s229 = smul.addr %s226, 48
      %s230 = sadd.s32 %s228, %s229
      %s231 = smul.addr %s230, 8
      %s232 = scalar_lea.vmem %s0, %s231
      %p233 = scmp.lt.s32.totalorder %s20, 1
      %s234 = scalar_select %p233, %s20, 1
      %p235 = scmp.lt.s32.totalorder %s21, 0
      %s236 = scalar_select %p235, %s21, 0
      %s237 = sadd.s32 %s236, %s234
      %s238 = smul.addr %s237, 2
      %s239 = scalar_lea.vmem %s3, %s238
      %p240 = scmp.lt.s32.totalorder %s20, 1
      %s241 = scalar_select %p240, %s20, 1
      %p242 = scmp.lt.s32.totalorder %s21, 0
      %s243 = scalar_select %p242, %s21, 0
      %s244 = smul.addr %s241, 2
      %s245 = sadd.s32 %s243, %s244
      %s246 = smul.addr %s245, 8
      %s247 = scalar_lea.vmem %s4, %s246
      %v248 = vld [vmem:[%s1] sm:$0xff]
      %v249 = vld [vmem:[%s1 + $0x8] sm:$0xff]
      %v250 = vld [vmem:[%s1 + $0x10] sm:$0xff]
      %v251 = vld [vmem:[%s1 + $0x18] sm:$0xff]
      %v252 = vld [vmem:[%s1 + $0x20] sm:$0xff]
      %v253 = vld [vmem:[%s1 + $0x28] sm:$0xff]
      %v254 = vld [vmem:[%s1 + $0x30] sm:$0xff]
      %v255 = vld [vmem:[%s1 + $0x38] sm:$0xff]
      %v256 = vld [vmem:[%s1 + $0x40] sm:$0xff]
      %v257 = vld [vmem:[%s2] sm:$0xff]
      %v258 = vld [vmem:[%s2 + $0x8] sm:$0xff]
      %v259 = vld [vmem:[%s2 + $0x10] sm:$0xff]
      %v260 = vld [vmem:[%s232] sm:$0xff]
      %v261 = vld [vmem:[%s232 + $0x8] sm:$0xff]
      %v262 = vld [vmem:[%s232 + $0x10] sm:$0xff]
      %v263 = vld [vmem:[%s232 + $0x18] sm:$0xff]
      %v264 = vld [vmem:[%s232 + $0x20] sm:$0xff]
      %v265 = vld [vmem:[%s232 + $0x28] sm:$0xff]
      %v266 = vld [vmem:[%s232 + $0x30] sm:$0xff]
      %v267 = vld [vmem:[%s232 + $0x38] sm:$0xff]
      %v268 = vld [vmem:[%s232 + $0x40] sm:$0xff]
      %v269 = vld [vmem:[%s232 + $0x48] sm:$0xff]
      %v270 = vld [vmem:[%s232 + $0x50] sm:$0xff]
      %v271 = vld [vmem:[%s232 + $0x58] sm:$0xff]
      %v272 = vld [vmem:[%s232 + $0x60] sm:$0xff]
      %v273 = vld [vmem:[%s232 + $0x68] sm:$0xff]
      %v274 = vld [vmem:[%s232 + $0x70] sm:$0xff]
      %v275 = vld [vmem:[%s232 + $0x78] sm:$0xff]
      %v276 = vld [vmem:[%s232 + $0x80] sm:$0xff]
      %v277 = vld [vmem:[%s232 + $0x88] sm:$0xff]
      %v278 = vld [vmem:[%s232 + $0x90] sm:$0xff]
      %v279 = vld [vmem:[%s232 + $0x98] sm:$0xff]
      %v280 = vld [vmem:[%s232 + $0xa0] sm:$0xff]
      %v281 = vld [vmem:[%s232 + $0xa8] sm:$0xff]
      %v282 = vld [vmem:[%s232 + $0xb0] sm:$0xff]
      %v283 = vld [vmem:[%s232 + $0xb8] sm:$0xff]
      %v284 = vld [vmem:[%s232 + $0xc0] sm:$0xff]
      %v285 = vld [vmem:[%s232 + $0xc8] sm:$0xff]
      %v286 = vld [vmem:[%s232 + $0xd0] sm:$0xff]
      %v287 = vld [vmem:[%s232 + $0xd8] sm:$0xff]
      %v288 = vld [vmem:[%s232 + $0xe0] sm:$0xff]
      %v289 = vld [vmem:[%s232 + $0xe8] sm:$0xff]
      %v290 = vld [vmem:[%s232 + $0xf0] sm:$0xff]
      %v291 = vld [vmem:[%s232 + $0xf8] sm:$0xff]
      %v292 = vld [vmem:[%s232 + $0x100] sm:$0xff]
      %v293 = vld [vmem:[%s232 + $0x108] sm:$0xff]
      %v294 = vld [vmem:[%s232 + $0x110] sm:$0xff]
      %v295 = vld [vmem:[%s232 + $0x118] sm:$0xff]
      %v296 = vld [vmem:[%s232 + $0x120] sm:$0xff]
      %v297 = vld [vmem:[%s232 + $0x128] sm:$0xff]
      %v298 = vld [vmem:[%s232 + $0x130] sm:$0xff]
      %v299 = vld [vmem:[%s232 + $0x138] sm:$0xff]
      %v300 = vld [vmem:[%s232 + $0x140] sm:$0xff]
      %v301 = vld [vmem:[%s232 + $0x148] sm:$0xff]
      %v302 = vld [vmem:[%s232 + $0x150] sm:$0xff]
      %v303 = vld [vmem:[%s232 + $0x158] sm:$0xff]
      %v304 = vld [vmem:[%s232 + $0x160] sm:$0xff]
      %v305 = vld [vmem:[%s232 + $0x168] sm:$0xff]
      %v306 = vld [vmem:[%s232 + $0x170] sm:$0xff]
      %v307 = vld [vmem:[%s232 + $0x178] sm:$0xff]
      %309 = vset.pattern.permute.xlu0 0
      %310 = vperm.xlu0 %309, %v257
      %v311 = vpop.permute.xlu0 %310
      %314 = vset.pattern.permute.xlu0 0
      %315 = vperm.xlu0 %314, %v258
      %v316 = vpop.permute.xlu0 %315
      %319 = vset.pattern.permute.xlu0 0
      %320 = vperm.xlu0 %319, %v259
      %v321 = vpop.permute.xlu0 %320
      %323 = vmatprep.subr.mxu0 0.0
      %v324 = vand.u32 %v260, 4294901760
      %325 = vmatpush1.msra.mxu0 %v324
      %326 = vmatprep.subr.mxu0 0.0
      %v327 = vand.u32 %v261, 4294901760
      %328 = vmatpush1.msra.mxu0 %v327
      %329 = vmatprep.subr.mxu0 0.0
      %v330 = vand.u32 %v262, 4294901760
      %331 = vmatpush1.msra.mxu0 %v330
      %332 = vmatprep.subr.mxu0 0.0
      %v333 = vand.u32 %v263, 4294901760
      %334 = vmatpush1.msra.mxu0 %v333
      %335 = vmatprep.subr.mxu0 0.0
      %v336 = vand.u32 %v264, 4294901760
      %337 = vmatpush1.msra.mxu0 %v336
      %338 = vmatprep.subr.mxu0 0.0
      %v339 = vand.u32 %v265, 4294901760
      %340 = vmatpush1.msra.mxu0 %v339
      %341 = vmatprep.subr.mxu0 0.0
      %v342 = vand.u32 %v266, 4294901760
      %343 = vmatpush1.msra.mxu0 %v342
      %344 = vmatprep.subr.mxu0 0.0
      %v345 = vand.u32 %v267, 4294901760
      %346 = vmatpush1.msra.mxu0 %v345
      %347 = vmatprep.subr.mxu0 0.0
      %v348 = vand.u32 %v268, 4294901760
      %349 = vmatpush1.msra.mxu0 %v348
      %350 = vmatprep.subr.mxu0 0.0
      %v351 = vand.u32 %v269, 4294901760
      %352 = vmatpush1.msra.mxu0 %v351
      %353 = vmatprep.subr.mxu0 0.0
      %v354 = vand.u32 %v270, 4294901760
      %355 = vmatpush1.msra.mxu0 %v354
      %356 = vmatprep.subr.mxu0 0.0
      %v357 = vand.u32 %v271, 4294901760
      %358 = vmatpush1.msra.mxu0 %v357
      %359 = vmatprep.subr.mxu0 0.0
      %v360 = vand.u32 %v272, 4294901760
      %361 = vmatpush1.msra.mxu0 %v360
      %362 = vmatprep.subr.mxu0 0.0
      %v363 = vand.u32 %v273, 4294901760
      %364 = vmatpush1.msra.mxu0 %v363
      %365 = vmatprep.subr.mxu0 0.0
      %v366 = vand.u32 %v274, 4294901760
      %367 = vmatpush1.msra.mxu0 %v366
      %368 = vmatprep.subr.mxu0 0.0
      %v369 = vand.u32 %v275, 4294901760
      %370 = vmatpush1.msra.mxu0 %v369
      %371 = vmatprep.subr.mxu0 0.0
      %v372 = vand.u32 %v276, 4294901760
      %373 = vmatpush1.msra.mxu0 %v372
      %374 = vmatprep.subr.mxu0 0.0
      %v375 = vand.u32 %v277, 4294901760
      %376 = vmatpush1.msra.mxu0 %v375
      %377 = vmatprep.subr.mxu0 0.0
      %v378 = vand.u32 %v278, 4294901760
      %379 = vmatpush1.msra.mxu0 %v378
      %380 = vmatprep.subr.mxu0 0.0
      %v381 = vand.u32 %v279, 4294901760
      %382 = vmatpush1.msra.mxu0 %v381
      %383 = vmatprep.subr.mxu0 0.0
      %v384 = vand.u32 %v280, 4294901760
      %385 = vmatpush1.msra.mxu0 %v384
      %386 = vmatprep.subr.mxu0 0.0
      %v387 = vand.u32 %v281, 4294901760
      %388 = vmatpush1.msra.mxu0 %v387
      %389 = vmatprep.subr.mxu0 0.0
      %v390 = vand.u32 %v282, 4294901760
      %391 = vmatpush1.msra.mxu0 %v390
      %392 = vmatprep.subr.mxu0 0.0
      %v393 = vand.u32 %v283, 4294901760
      %394 = vmatpush1.msra.mxu0 %v393
      %395 = vmatprep.subr.mxu0 0.0
      %v396 = vand.u32 %v284, 4294901760
      %397 = vmatpush1.msra.mxu0 %v396
      %398 = vmatprep.subr.mxu0 0.0
      %v399 = vand.u32 %v285, 4294901760
      %400 = vmatpush1.msra.mxu0 %v399
      %401 = vmatprep.subr.mxu0 0.0
      %v402 = vand.u32 %v286, 4294901760
      %403 = vmatpush1.msra.mxu0 %v402
      %404 = vmatprep.subr.mxu0 0.0
      %v405 = vand.u32 %v287, 4294901760
      %406 = vmatpush1.msra.mxu0 %v405
      %407 = vmatprep.subr.mxu0 0.0
      %v408 = vand.u32 %v288, 4294901760
      %409 = vmatpush1.msra.mxu0 %v408
      %410 = vmatprep.subr.mxu0 0.0
      %v411 = vand.u32 %v289, 4294901760
      %412 = vmatpush1.msra.mxu0 %v411
      %413 = vmatprep.subr.mxu0 0.0
      %v414 = vand.u32 %v290, 4294901760
      %415 = vmatpush1.msra.mxu0 %v414
      %416 = vmatprep.subr.mxu0 0.0
      %v417 = vand.u32 %v291, 4294901760
      %418 = vmatpush1.msra.mxu0 %v417
      %v419 = vand.u32 %v249, 4294901760
      %v420 = vsub.f32 %v249, %v419
      %v421 = vand.u32 %v420, 4294901760
      %v422 = vsub.f32 %v420, %v421
      %v423 = vand.u32 %v422, 4294901760
      %424 = vmatprep.mubr.f32.mxu0 %v423
      %v425 = vand.u32 %v248, 4294901760
      %v426 = vsub.f32 %v248, %v425
      %v427 = vand.u32 %v426, 4294901760
      %v428 = vsub.f32 %v426, %v427
      %v429 = vand.u32 %v428, 4294901760
      %430 = vmatmul.mubr.f32.gmra.mrb[0].mxu0 %v429
      %v431 = vpop.f32.mrb[0].mxu0
      %v432 = vadd.f32 %v311, %v431
      %v433 = vpop.f32.mrb[0].mxu0
      %v434 = vand.u32 %v252, 4294901760
      %v435 = vsub.f32 %v252, %v434
      %v436 = vand.u32 %v435, 4294901760
      %v437 = vsub.f32 %v435, %v436
      %v438 = vand.u32 %v437, 4294901760
      %439 = vmatprep.mubr.f32.mxu0 %v438
      %v440 = vand.u32 %v251, 4294901760
      %v441 = vsub.f32 %v251, %v440
      %v442 = vand.u32 %v441, 4294901760
      %v443 = vsub.f32 %v441, %v442
      %v444 = vand.u32 %v443, 4294901760
      %445 = vmatmul.mubr.f32.gmra.mrb[0].mxu0 %v444
      %v446 = vpop.f32.mrb[0].mxu0
      %v447 = vadd.f32 %v316, %v446
      %v448 = vpop.f32.mrb[0].mxu0
      %v449 = vand.u32 %v255, 4294901760
      %v450 = vsub.f32 %v255, %v449
      %v451 = vand.u32 %v450, 4294901760
      %v452 = vsub.f32 %v450, %v451
      %v453 = vand.u32 %v452, 4294901760
      %454 = vmatprep.mubr.f32.mxu0 %v453
      %v455 = vand.u32 %v254, 4294901760
      %v456 = vsub.f32 %v254, %v455
      %v457 = vand.u32 %v456, 4294901760
      %v458 = vsub.f32 %v456, %v457
      %v459 = vand.u32 %v458, 4294901760
      %460 = vmatmul.mubr.f32.gmra.mrb[0].mxu0 %v459
      %v461 = vpop.f32.mrb[0].mxu0
      %v462 = vadd.f32 %v321, %v461
      %v463 = vpop.f32.mrb[0].mxu0
      %464 = vdwg.mxu0
      %465 = vmatprep.subr.mxu0 0.0
      %v466 = vand.u32 %v260, 4294901760
      %v467 = vsub.f32 %v260, %v466
      %v468 = vand.u32 %v467, 4294901760
      %v469 = vsub.f32 %v467, %v468
      %v470 = vand.u32 %v469, 4294901760
      %471 = vmatpush1.msra.mxu0 %v470
      %472 = vmatprep.subr.mxu0 0.0
      %v473 = vand.u32 %v261, 4294901760
      %v474 = vsub.f32 %v261, %v473
      %v475 = vand.u32 %v474, 4294901760
      %v476 = vsub.f32 %v474, %v475
      %v477 = vand.u32 %v476, 4294901760
      %478 = vmatpush1.msra.mxu0 %v477
      %479 = vmatprep.subr.mxu0 0.0
      %v480 = vand.u32 %v262, 4294901760
      %v481 = vsub.f32 %v262, %v480
      %v482 = vand.u32 %v481, 4294901760
      %v483 = vsub.f32 %v481, %v482
      %v484 = vand.u32 %v483, 4294901760
      %485 = vmatpush1.msra.mxu0 %v484
      %486 = vmatprep.subr.mxu0 0.0
      %v487 = vand.u32 %v263, 4294901760
      %v488 = vsub.f32 %v263, %v487
      %v489 = vand.u32 %v488, 4294901760
      %v490 = vsub.f32 %v488, %v489
      %v491 = vand.u32 %v490, 4294901760
      %492 = vmatpush1.msra.mxu0 %v491
      %493 = vmatprep.subr.mxu0 0.0
      %v494 = vand.u32 %v264, 4294901760
      %v495 = vsub.f32 %v264, %v494
      %v496 = vand.u32 %v495, 4294901760
      %v497 = vsub.f32 %v495, %v496
      %v498 = vand.u32 %v497, 4294901760
      %499 = vmatpush1.msra.mxu0 %v498
      %500 = vmatprep.subr.mxu0 0.0
      %v501 = vand.u32 %v265, 4294901760
      %v502 = vsub.f32 %v265, %v501
      %v503 = vand.u32 %v502, 4294901760
      %v504 = vsub.f32 %v502, %v503
      %v505 = vand.u32 %v504, 4294901760
      %506 = vmatpush1.msra.mxu0 %v505
      %507 = vmatprep.subr.mxu0 0.0
      %v508 = vand.u32 %v266, 4294901760
      %v509 = vsub.f32 %v266, %v508
      %v510 = vand.u32 %v509, 4294901760
      %v511 = vsub.f32 %v509, %v510
      %v512 = vand.u32 %v511, 4294901760
      %513 = vmatpush1.msra.mxu0 %v512
      %514 = vmatprep.subr.mxu0 0.0
      %v515 = vand.u32 %v267, 4294901760
      %v516 = vsub.f32 %v267, %v515
      %v517 = vand.u32 %v516, 4294901760
      %v518 = vsub.f32 %v516, %v517
      %v519 = vand.u32 %v518, 4294901760
      %520 = vmatpush1.msra.mxu0 %v519
      %521 = vmatprep.subr.mxu0 0.0
      %v522 = vand.u32 %v268, 4294901760
      %v523 = vsub.f32 %v268, %v522
      %v524 = vand.u32 %v523, 4294901760
      %v525 = vsub.f32 %v523, %v524
      %v526 = vand.u32 %v525, 4294901760
      %527 = vmatpush1.msra.mxu0 %v526
      %528 = vmatprep.subr.mxu0 0.0
      %v529 = vand.u32 %v269, 4294901760
      %v530 = vsub.f32 %v269, %v529
      %v531 = vand.u32 %v530, 4294901760
      %v532 = vsub.f32 %v530, %v531
      %v533 = vand.u32 %v532, 4294901760
      %534 = vmatpush1.msra.mxu0 %v533
      %535 = vmatprep.subr.mxu0 0.0
      %v536 = vand.u32 %v270, 4294901760
      %v537 = vsub.f32 %v270, %v536
      %v538 = vand.u32 %v537, 4294901760
      %v539 = vsub.f32 %v537, %v538
      %v540 = vand.u32 %v539, 4294901760
      %541 = vmatpush1.msra.mxu0 %v540
      %542 = vmatprep.subr.mxu0 0.0
      %v543 = vand.u32 %v271, 4294901760
      %v544 = vsub.f32 %v271, %v543
      %v545 = vand.u32 %v544, 4294901760
      %v546 = vsub.f32 %v544, %v545
      %v547 = vand.u32 %v546, 4294901760
      %548 = vmatpush1.msra.mxu0 %v547
      %549 = vmatprep.subr.mxu0 0.0
      %v550 = vand.u32 %v272, 4294901760
      %v551 = vsub.f32 %v272, %v550
      %v552 = vand.u32 %v551, 4294901760
      %v553 = vsub.f32 %v551, %v552
      %v554 = vand.u32 %v553, 4294901760
      %555 = vmatpush1.msra.mxu0 %v554
      %556 = vmatprep.subr.mxu0 0.0
      %v557 = vand.u32 %v273, 4294901760
      %v558 = vsub.f32 %v273, %v557
      %v559 = vand.u32 %v558, 4294901760
      %v560 = vsub.f32 %v558, %v559
      %v561 = vand.u32 %v560, 4294901760
      %562 = vmatpush1.msra.mxu0 %v561
      %563 = vmatprep.subr.mxu0 0.0
      %v564 = vand.u32 %v274, 4294901760
      %v565 = vsub.f32 %v274, %v564
      %v566 = vand.u32 %v565, 4294901760
      %v567 = vsub.f32 %v565, %v566
      %v568 = vand.u32 %v567, 4294901760
      %569 = vmatpush1.msra.mxu0 %v568
      %570 = vmatprep.subr.mxu0 0.0
      %v571 = vand.u32 %v275, 4294901760
      %v572 = vsub.f32 %v275, %v571
      %v573 = vand.u32 %v572, 4294901760
      %v574 = vsub.f32 %v572, %v573
      %v575 = vand.u32 %v574, 4294901760
      %576 = vmatpush1.msra.mxu0 %v575
      %577 = vmatprep.subr.mxu0 0.0
      %v578 = vand.u32 %v276, 4294901760
      %v579 = vsub.f32 %v276, %v578
      %v580 = vand.u32 %v579, 4294901760
      %v581 = vsub.f32 %v579, %v580
      %v582 = vand.u32 %v581, 4294901760
      %583 = vmatpush1.msra.mxu0 %v582
      %584 = vmatprep.subr.mxu0 0.0
      %v585 = vand.u32 %v277, 4294901760
      %v586 = vsub.f32 %v277, %v585
      %v587 = vand.u32 %v586, 4294901760
      %v588 = vsub.f32 %v586, %v587
      %v589 = vand.u32 %v588, 4294901760
      %590 = vmatpush1.msra.mxu0 %v589
      %591 = vmatprep.subr.mxu0 0.0
      %v592 = vand.u32 %v278, 4294901760
      %v593 = vsub.f32 %v278, %v592
      %v594 = vand.u32 %v593, 4294901760
      %v595 = vsub.f32 %v593, %v594
      %v596 = vand.u32 %v595, 4294901760
      %597 = vmatpush1.msra.mxu0 %v596
      %598 = vmatprep.subr.mxu0 0.0
      %v599 = vand.u32 %v279, 4294901760
      %v600 = vsub.f32 %v279, %v599
      %v601 = vand.u32 %v600, 4294901760
      %v602 = vsub.f32 %v600, %v601
      %v603 = vand.u32 %v602, 4294901760
      %604 = vmatpush1.msra.mxu0 %v603
      %605 = vmatprep.subr.mxu0 0.0
      %v606 = vand.u32 %v280, 4294901760
      %v607 = vsub.f32 %v280, %v606
      %v608 = vand.u32 %v607, 4294901760
      %v609 = vsub.f32 %v607, %v608
      %v610 = vand.u32 %v609, 4294901760
      %611 = vmatpush1.msra.mxu0 %v610
      %612 = vmatprep.subr.mxu0 0.0
      %v613 = vand.u32 %v281, 4294901760
      %v614 = vsub.f32 %v281, %v613
      %v615 = vand.u32 %v614, 4294901760
      %v616 = vsub.f32 %v614, %v615
      %v617 = vand.u32 %v616, 4294901760
      %618 = vmatpush1.msra.mxu0 %v617
      %619 = vmatprep.subr.mxu0 0.0
      %v620 = vand.u32 %v282, 4294901760
      %v621 = vsub.f32 %v282, %v620
      %v622 = vand.u32 %v621, 4294901760
      %v623 = vsub.f32 %v621, %v622
      %v624 = vand.u32 %v623, 4294901760
      %625 = vmatpush1.msra.mxu0 %v624
      %626 = vmatprep.subr.mxu0 0.0
      %v627 = vand.u32 %v283, 4294901760
      %v628 = vsub.f32 %v283, %v627
      %v629 = vand.u32 %v628, 4294901760
      %v630 = vsub.f32 %v628, %v629
      %v631 = vand.u32 %v630, 4294901760
      %632 = vmatpush1.msra.mxu0 %v631
      %633 = vmatprep.subr.mxu0 0.0
      %v634 = vand.u32 %v284, 4294901760
      %v635 = vsub.f32 %v284, %v634
      %v636 = vand.u32 %v635, 4294901760
      %v637 = vsub.f32 %v635, %v636
      %v638 = vand.u32 %v637, 4294901760
      %639 = vmatpush1.msra.mxu0 %v638
      %640 = vmatprep.subr.mxu0 0.0
      %v641 = vand.u32 %v285, 4294901760
      %v642 = vsub.f32 %v285, %v641
      %v643 = vand.u32 %v642, 4294901760
      %v644 = vsub.f32 %v642, %v643
      %v645 = vand.u32 %v644, 4294901760
      %646 = vmatpush1.msra.mxu0 %v645
      %647 = vmatprep.subr.mxu0 0.0
      %v648 = vand.u32 %v286, 4294901760
      %v649 = vsub.f32 %v286, %v648
      %v650 = vand.u32 %v649, 4294901760
      %v651 = vsub.f32 %v649, %v650
      %v652 = vand.u32 %v651, 4294901760
      %653 = vmatpush1.msra.mxu0 %v652
      %654 = vmatprep.subr.mxu0 0.0
      %v655 = vand.u32 %v287, 4294901760
      %v656 = vsub.f32 %v287, %v655
      %v657 = vand.u32 %v656, 4294901760
      %v658 = vsub.f32 %v656, %v657
      %v659 = vand.u32 %v658, 4294901760
      %660 = vmatpush1.msra.mxu0 %v659
      %661 = vmatprep.subr.mxu0 0.0
      %v662 = vand.u32 %v288, 4294901760
      %v663 = vsub.f32 %v288, %v662
      %v664 = vand.u32 %v663, 4294901760
      %v665 = vsub.f32 %v663, %v664
      %v666 = vand.u32 %v665, 4294901760
      %667 = vmatpush1.msra.mxu0 %v666
      %668 = vmatprep.subr.mxu0 0.0
      %v669 = vand.u32 %v289, 4294901760
      %v670 = vsub.f32 %v289, %v669
      %v671 = vand.u32 %v670, 4294901760
      %v672 = vsub.f32 %v670, %v671
      %v673 = vand.u32 %v672, 4294901760
      %674 = vmatpush1.msra.mxu0 %v673
      %675 = vmatprep.subr.mxu0 0.0
      %v676 = vand.u32 %v290, 4294901760
      %v677 = vsub.f32 %v290, %v676
      %v678 = vand.u32 %v677, 4294901760
      %v679 = vsub.f32 %v677, %v678
      %v680 = vand.u32 %v679, 4294901760
      %681 = vmatpush1.msra.mxu0 %v680
      %682 = vmatprep.subr.mxu0 0.0
      %v683 = vand.u32 %v291, 4294901760
      %v684 = vsub.f32 %v291, %v683
      %v685 = vand.u32 %v684, 4294901760
      %v686 = vsub.f32 %v684, %v685
      %v687 = vand.u32 %v686, 4294901760
      %688 = vmatpush1.msra.mxu0 %v687
      %v689 = vand.u32 %v249, 4294901760
      %690 = vmatprep.mubr.f32.mxu0 %v689
      %v691 = vand.u32 %v248, 4294901760
      %692 = vmatmul.mubr.f32.gmra.mrb[0].mxu0 %v691
      %v693 = vpop.f32.mrb[0].mxu0
      %v694 = vadd.f32 %v432, %v693
      %v695 = vpop.f32.mrb[0].mxu0
      %v696 = vand.u32 %v252, 4294901760
      %697 = vmatprep.mubr.f32.mxu0 %v696
      %v698 = vand.u32 %v251, 4294901760
      %699 = vmatmul.mubr.f32.gmra.mrb[0].mxu0 %v698
      %v700 = vpop.f32.mrb[0].mxu0
      %v701 = vadd.f32 %v447, %v700
      %v702 = vpop.f32.mrb[0].mxu0
      %v703 = vand.u32 %v255, 4294901760
      %704 = vmatprep.mubr.f32.mxu0 %v703
      %v705 = vand.u32 %v254, 4294901760
      %706 = vmatmul.mubr.f32.gmra.mrb[0].mxu0 %v705
      %v707 = vpop.f32.mrb[0].mxu0
      %v708 = vadd.f32 %v462, %v707
      %v709 = vpop.f32.mrb[0].mxu0
      %710 = vdwg.mxu0
      %711 = vmatprep.subr.mxu0 0.0
      %v712 = vand.u32 %v260, 4294901760
      %v713 = vsub.f32 %v260, %v712
      %714 = vmatpush1.msra.mxu0 %v713
      %715 = vmatprep.subr.mxu0 0.0
      %v716 = vand.u32 %v261, 4294901760
      %v717 = vsub.f32 %v261, %v716
      %718 = vmatpush1.msra.mxu0 %v717
      %719 = vmatprep.subr.mxu0 0.0
      %v720 = vand.u32 %v262, 4294901760
      %v721 = vsub.f32 %v262, %v720
      %722 = vmatpush1.msra.mxu0 %v721
      %723 = vmatprep.subr.mxu0 0.0
      %v724 = vand.u32 %v263, 4294901760
      %v725 = vsub.f32 %v263, %v724
      %726 = vmatpush1.msra.mxu0 %v725
      %727 = vmatprep.subr.mxu0 0.0
      %v728 = vand.u32 %v264, 4294901760
      %v729 = vsub.f32 %v264, %v728
      %730 = vmatpush1.msra.mxu0 %v729
      %731 = vmatprep.subr.mxu0 0.0
      %v732 = vand.u32 %v265, 4294901760
      %v733 = vsub.f32 %v265, %v732
      %734 = vmatpush1.msra.mxu0 %v733
      %735 = vmatprep.subr.mxu0 0.0
      %v736 = vand.u32 %v266, 4294901760
      %v737 = vsub.f32 %v266, %v736
      %738 = vmatpush1.msra.mxu0 %v737
      %739 = vmatprep.subr.mxu0 0.0
      %v740 = vand.u32 %v267, 4294901760
      %v741 = vsub.f32 %v267, %v740
      %742 = vmatpush1.msra.mxu0 %v741
      %743 = vmatprep.subr.mxu0 0.0
      %v744 = vand.u32 %v268, 4294901760
      %v745 = vsub.f32 %v268, %v744
      %746 = vmatpush1.msra.mxu0 %v745
      %747 = vmatprep.subr.mxu0 0.0
      %v748 = vand.u32 %v269, 4294901760
      %v749 = vsub.f32 %v269, %v748
      %750 = vmatpush1.msra.mxu0 %v749
      %751 = vmatprep.subr.mxu0 0.0
      %v752 = vand.u32 %v270, 4294901760
      %v753 = vsub.f32 %v270, %v752
      %754 = vmatpush1.msra.mxu0 %v753
      %755 = vmatprep.subr.mxu0 0.0
      %v756 = vand.u32 %v271, 4294901760
      %v757 = vsub.f32 %v271, %v756
      %758 = vmatpush1.msra.mxu0 %v757
      %759 = vmatprep.subr.mxu0 0.0
      %v760 = vand.u32 %v272, 4294901760
      %v761 = vsub.f32 %v272, %v760
      %762 = vmatpush1.msra.mxu0 %v761
      %763 = vmatprep.subr.mxu0 0.0
      %v764 = vand.u32 %v273, 4294901760
      %v765 = vsub.f32 %v273, %v764
      %766 = vmatpush1.msra.mxu0 %v765
      %767 = vmatprep.subr.mxu0 0.0
      %v768 = vand.u32 %v274, 4294901760
      %v769 = vsub.f32 %v274, %v768
      %770 = vmatpush1.msra.mxu0 %v769
      %771 = vmatprep.subr.mxu0 0.0
      %v772 = vand.u32 %v275, 4294901760
      %v773 = vsub.f32 %v275, %v772
      %774 = vmatpush1.msra.mxu0 %v773
      %775 = vmatprep.subr.mxu0 0.0
      %v776 = vand.u32 %v276, 4294901760
      %v777 = vsub.f32 %v276, %v776
      %778 = vmatpush1.msra.mxu0 %v777
      %779 = vmatprep.subr.mxu0 0.0
      %v780 = vand.u32 %v277, 4294901760
      %v781 = vsub.f32 %v277, %v780
      %782 = vmatpush1.msra.mxu0 %v781
      %783 = vmatprep.subr.mxu0 0.0
      %v784 = vand.u32 %v278, 4294901760
      %v785 = vsub.f32 %v278, %v784
      %786 = vmatpush1.msra.mxu0 %v785
      %787 = vmatprep.subr.mxu0 0.0
      %v788 = vand.u32 %v279, 4294901760
      %v789 = vsub.f32 %v279, %v788
      %790 = vmatpush1.msra.mxu0 %v789
      %791 = vmatprep.subr.mxu0 0.0
      %v792 = vand.u32 %v280, 4294901760
      %v793 = vsub.f32 %v280, %v792
      %794 = vmatpush1.msra.mxu0 %v793
      %795 = vmatprep.subr.mxu0 0.0
      %v796 = vand.u32 %v281, 4294901760
      %v797 = vsub.f32 %v281, %v796
      %798 = vmatpush1.msra.mxu0 %v797
      %799 = vmatprep.subr.mxu0 0.0
      %v800 = vand.u32 %v282, 4294901760
      %v801 = vsub.f32 %v282, %v800
      %802 = vmatpush1.msra.mxu0 %v801
      %803 = vmatprep.subr.mxu0 0.0
      %v804 = vand.u32 %v283, 4294901760
      %v805 = vsub.f32 %v283, %v804
      %806 = vmatpush1.msra.mxu0 %v805
      %807 = vmatprep.subr.mxu0 0.0
      %v808 = vand.u32 %v284, 4294901760
      %v809 = vsub.f32 %v284, %v808
      %810 = vmatpush1.msra.mxu0 %v809
      %811 = vmatprep.subr.mxu0 0.0
      %v812 = vand.u32 %v285, 4294901760
      %v813 = vsub.f32 %v285, %v812
      %814 = vmatpush1.msra.mxu0 %v813
      %815 = vmatprep.subr.mxu0 0.0
      %v816 = vand.u32 %v286, 4294901760
      %v817 = vsub.f32 %v286, %v816
      %818 = vmatpush1.msra.mxu0 %v817
      %819 = vmatprep.subr.mxu0 0.0
      %v820 = vand.u32 %v287, 4294901760
      %v821 = vsub.f32 %v287, %v820
      %822 = vmatpush1.msra.mxu0 %v821
      %823 = vmatprep.subr.mxu0 0.0
      %v824 = vand.u32 %v288, 4294901760
      %v825 = vsub.f32 %v288, %v824
      %826 = vmatpush1.msra.mxu0 %v825
      %827 = vmatprep.subr.mxu0 0.0
      %v828 = vand.u32 %v289, 4294901760
      %v829 = vsub.f32 %v289, %v828
      %830 = vmatpush1.msra.mxu0 %v829
      %831 = vmatprep.subr.mxu0 0.0
      %v832 = vand.u32 %v290, 4294901760
      %v833 = vsub.f32 %v290, %v832
      %834 = vmatpush1.msra.mxu0 %v833
      %835 = vmatprep.subr.mxu0 0.0
      %v836 = vand.u32 %v291, 4294901760
      %v837 = vsub.f32 %v291, %v836
      %838 = vmatpush1.msra.mxu0 %v837
      %v839 = vand.u32 %v249, 4294901760
      %v840 = vsub.f32 %v249, %v839
      %841 = vmatprep.mubr.f32.mxu0 %v840
      %v842 = vand.u32 %v248, 4294901760
      %v843 = vsub.f32 %v248, %v842
      %844 = vmatmul.mubr.f32.gmra.mrb[0].mxu0 %v843
      %v845 = vpop.f32.mrb[0].mxu0
      %v846 = vadd.f32 %v694, %v845
      %v847 = vpop.f32.mrb[0].mxu0
      %v848 = vand.u32 %v252, 4294901760
      %v849 = vsub.f32 %v252, %v848
      %850 = vmatprep.mubr.f32.mxu0 %v849
      %v851 = vand.u32 %v251, 4294901760
      %v852 = vsub.f32 %v251, %v851
      %853 = vmatmul.mubr.f32.gmra.mrb[0].mxu0 %v852
      %v854 = vpop.f32.mrb[0].mxu0
      %v855 = vadd.f32 %v701, %v854
      %v856 = vpop.f32.mrb[0].mxu0
      %v857 = vand.u32 %v255, 4294901760
      %v858 = vsub.f32 %v255, %v857
      %859 = vmatprep.mubr.f32.mxu0 %v858
      %v860 = vand.u32 %v254, 4294901760
      %v861 = vsub.f32 %v254, %v860
      %862 = vmatmul.mubr.f32.gmra.mrb[0].mxu0 %v861
      %v863 = vpop.f32.mrb[0].mxu0
      %v864 = vadd.f32 %v708, %v863
      %v865 = vpop.f32.mrb[0].mxu0
      %866 = vdwg.mxu0
      %867 = vmatprep.subr.mxu0 0.0
      %v868 = vand.u32 %v260, 4294901760
      %869 = vmatpush1.msra.mxu0 %v868
      %870 = vmatprep.subr.mxu0 0.0
      %v871 = vand.u32 %v261, 4294901760
      %872 = vmatpush1.msra.mxu0 %v871
      %873 = vmatprep.subr.mxu0 0.0
      %v874 = vand.u32 %v262, 4294901760
      %875 = vmatpush1.msra.mxu0 %v874
      %876 = vmatprep.subr.mxu0 0.0
      %v877 = vand.u32 %v263, 4294901760
      %878 = vmatpush1.msra.mxu0 %v877
      %879 = vmatprep.subr.mxu0 0.0
      %v880 = vand.u32 %v264, 4294901760
      %881 = vmatpush1.msra.mxu0 %v880
      %882 = vmatprep.subr.mxu0 0.0
      %v883 = vand.u32 %v265, 4294901760
      %884 = vmatpush1.msra.mxu0 %v883
      %885 = vmatprep.subr.mxu0 0.0
      %v886 = vand.u32 %v266, 4294901760
      %887 = vmatpush1.msra.mxu0 %v886
      %888 = vmatprep.subr.mxu0 0.0
      %v889 = vand.u32 %v267, 4294901760
      %890 = vmatpush1.msra.mxu0 %v889
      %891 = vmatprep.subr.mxu0 0.0
      %v892 = vand.u32 %v268, 4294901760
      %893 = vmatpush1.msra.mxu0 %v892
      %894 = vmatprep.subr.mxu0 0.0
      %v895 = vand.u32 %v269, 4294901760
      %896 = vmatpush1.msra.mxu0 %v895
      %897 = vmatprep.subr.mxu0 0.0
      %v898 = vand.u32 %v270, 4294901760
      %899 = vmatpush1.msra.mxu0 %v898
      %900 = vmatprep.subr.mxu0 0.0
      %v901 = vand.u32 %v271, 4294901760
      %902 = vmatpush1.msra.mxu0 %v901
      %903 = vmatprep.subr.mxu0 0.0
      %v904 = vand.u32 %v272, 4294901760
      %905 = vmatpush1.msra.mxu0 %v904
      %906 = vmatprep.subr.mxu0 0.0
      %v907 = vand.u32 %v273, 4294901760
      %908 = vmatpush1.msra.mxu0 %v907
      %909 = vmatprep.subr.mxu0 0.0
      %v910 = vand.u32 %v274, 4294901760
      %911 = vmatpush1.msra.mxu0 %v910
      %912 = vmatprep.subr.mxu0 0.0
      %v913 = vand.u32 %v275, 4294901760
      %914 = vmatpush1.msra.mxu0 %v913
      %915 = vmatprep.subr.mxu0 0.0
      %v916 = vand.u32 %v276, 4294901760
      %917 = vmatpush1.msra.mxu0 %v916
      %918 = vmatprep.subr.mxu0 0.0
      %v919 = vand.u32 %v277, 4294901760
      %920 = vmatpush1.msra.mxu0 %v919
      %921 = vmatprep.subr.mxu0 0.0
      %v922 = vand.u32 %v278, 4294901760
      %923 = vmatpush1.msra.mxu0 %v922
      %924 = vmatprep.subr.mxu0 0.0
      %v925 = vand.u32 %v279, 4294901760
      %926 = vmatpush1.msra.mxu0 %v925
      %927 = vmatprep.subr.mxu0 0.0
      %v928 = vand.u32 %v280, 4294901760
      %929 = vmatpush1.msra.mxu0 %v928
      %930 = vmatprep.subr.mxu0 0.0
      %v931 = vand.u32 %v281, 4294901760
      %932 = vmatpush1.msra.mxu0 %v931
      %933 = vmatprep.subr.mxu0 0.0
      %v934 = vand.u32 %v282, 4294901760
      %935 = vmatpush1.msra.mxu0 %v934
      %936 = vmatprep.subr.mxu0 0.0
      %v937 = vand.u32 %v283, 4294901760
      %938 = vmatpush1.msra.mxu0 %v937
      %939 = vmatprep.subr.mxu0 0.0
      %v940 = vand.u32 %v284, 4294901760
      %941 = vmatpush1.msra.mxu0 %v940
      %942 = vmatprep.subr.mxu0 0.0
      %v943 = vand.u32 %v285, 4294901760
      %944 = vmatpush1.msra.mxu0 %v943
      %945 = vmatprep.subr.mxu0 0.0
      %v946 = vand.u32 %v286, 4294901760
      %947 = vmatpush1.msra.mxu0 %v946
      %948 = vmatprep.subr.mxu0 0.0
      %v949 = vand.u32 %v287, 4294901760
      %950 = vmatpush1.msra.mxu0 %v949
      %951 = vmatprep.subr.mxu0 0.0
      %v952 = vand.u32 %v288, 4294901760
      %953 = vmatpush1.msra.mxu0 %v952
      %954 = vmatprep.subr.mxu0 0.0
      %v955 = vand.u32 %v289, 4294901760
      %956 = vmatpush1.msra.mxu0 %v955
      %957 = vmatprep.subr.mxu0 0.0
      %v958 = vand.u32 %v290, 4294901760
      %959 = vmatpush1.msra.mxu0 %v958
      %960 = vmatprep.subr.mxu0 0.0
      %v961 = vand.u32 %v291, 4294901760
      %962 = vmatpush1.msra.mxu0 %v961
      %v963 = vand.u32 %v249, 4294901760
      %v964 = vsub.f32 %v249, %v963
      %v965 = vand.u32 %v964, 4294901760
      %966 = vmatprep.mubr.f32.mxu0 %v965
      %v967 = vand.u32 %v248, 4294901760
      %v968 = vsub.f32 %v248, %v967
      %v969 = vand.u32 %v968, 4294901760
      %970 = vmatmul.mubr.f32.gmra.mrb[0].mxu0 %v969
      %v971 = vpop.f32.mrb[0].mxu0
      %v972 = vadd.f32 %v846, %v971
      %v973 = vpop.f32.mrb[0].mxu0
      %v974 = vand.u32 %v252, 4294901760
      %v975 = vsub.f32 %v252, %v974
      %v976 = vand.u32 %v975, 4294901760
      %977 = vmatprep.mubr.f32.mxu0 %v976
      %v978 = vand.u32 %v251, 4294901760
      %v979 = vsub.f32 %v251, %v978
      %v980 = vand.u32 %v979, 4294901760
      %981 = vmatmul.mubr.f32.gmra.mrb[0].mxu0 %v980
      %v982 = vpop.f32.mrb[0].mxu0
      %v983 = vadd.f32 %v855, %v982
      %v984 = vpop.f32.mrb[0].mxu0
      %v985 = vand.u32 %v255, 4294901760
      %v986 = vsub.f32 %v255, %v985
      %v987 = vand.u32 %v986, 4294901760
      %988 = vmatprep.mubr.f32.mxu0 %v987
      %v989 = vand.u32 %v254, 4294901760
      %v990 = vsub.f32 %v254, %v989
      %v991 = vand.u32 %v990, 4294901760
      %992 = vmatmul.mubr.f32.gmra.mrb[0].mxu0 %v991
      %v993 = vpop.f32.mrb[0].mxu0
      %v994 = vadd.f32 %v864, %v993
      %v995 = vpop.f32.mrb[0].mxu0
      %996 = vdwg.mxu0
      %997 = vmatprep.subr.mxu0 0.0
      %v998 = vand.u32 %v260, 4294901760
      %v999 = vsub.f32 %v260, %v998
      %v1000 = vand.u32 %v999, 4294901760
      %1001 = vmatpush1.msra.mxu0 %v1000
      %1002 = vmatprep.subr.mxu0 0.0
      %v1003 = vand.u32 %v261, 4294901760
      %v1004 = vsub.f32 %v261, %v1003
      %v1005 = vand.u32 %v1004, 4294901760
      %1006 = vmatpush1.msra.mxu0 %v1005
      %1007 = vmatprep.subr.mxu0 0.0
      %v1008 = vand.u32 %v262, 4294901760
      %v1009 = vsub.f32 %v262, %v1008
      %v1010 = vand.u32 %v1009, 4294901760
      %1011 = vmatpush1.msra.mxu0 %v1010
      %1012 = vmatprep.subr.mxu0 0.0
      %v1013 = vand.u32 %v263, 4294901760
      %v1014 = vsub.f32 %v263, %v1013
      %v1015 = vand.u32 %v1014, 4294901760
      %1016 = vmatpush1.msra.mxu0 %v1015
      %1017 = vmatprep.subr.mxu0 0.0
      %v1018 = vand.u32 %v264, 4294901760
      %v1019 = vsub.f32 %v264, %v1018
      %v1020 = vand.u32 %v1019, 4294901760
      %1021 = vmatpush1.msra.mxu0 %v1020
      %1022 = vmatprep.subr.mxu0 0.0
      %v1023 = vand.u32 %v265, 4294901760
      %v1024 = vsub.f32 %v265, %v1023
      %v1025 = vand.u32 %v1024, 4294901760
      %1026 = vmatpush1.msra.mxu0 %v1025
      %1027 = vmatprep.subr.mxu0 0.0
      %v1028 = vand.u32 %v266, 4294901760
      %v1029 = vsub.f32 %v266, %v1028
      %v1030 = vand.u32 %v1029, 4294901760
      %1031 = vmatpush1.msra.mxu0 %v1030
      %1032 = vmatprep.subr.mxu0 0.0
      %v1033 = vand.u32 %v267, 4294901760
      %v1034 = vsub.f32 %v267, %v1033
      %v1035 = vand.u32 %v1034, 4294901760
      %1036 = vmatpush1.msra.mxu0 %v1035
      %1037 = vmatprep.subr.mxu0 0.0
      %v1038 = vand.u32 %v268, 4294901760
      %v1039 = vsub.f32 %v268, %v1038
      %v1040 = vand.u32 %v1039, 4294901760
      %1041 = vmatpush1.msra.mxu0 %v1040
      %1042 = vmatprep.subr.mxu0 0.0
      %v1043 = vand.u32 %v269, 4294901760
      %v1044 = vsub.f32 %v269, %v1043
      %v1045 = vand.u32 %v1044, 4294901760
      %1046 = vmatpush1.msra.mxu0 %v1045
      %1047 = vmatprep.subr.mxu0 0.0
      %v1048 = vand.u32 %v270, 4294901760
      %v1049 = vsub.f32 %v270, %v1048
      %v1050 = vand.u32 %v1049, 4294901760
      %1051 = vmatpush1.msra.mxu0 %v1050
      %1052 = vmatprep.subr.mxu0 0.0
      %v1053 = vand.u32 %v271, 4294901760
      %v1054 = vsub.f32 %v271, %v1053
      %v1055 = vand.u32 %v1054, 4294901760
      %1056 = vmatpush1.msra.mxu0 %v1055
      %1057 = vmatprep.subr.mxu0 0.0
      %v1058 = vand.u32 %v272, 4294901760
      %v1059 = vsub.f32 %v272, %v1058
      %v1060 = vand.u32 %v1059, 4294901760
      %1061 = vmatpush1.msra.mxu0 %v1060
      %1062 = vmatprep.subr.mxu0 0.0
      %v1063 = vand.u32 %v273, 4294901760
      %v1064 = vsub.f32 %v273, %v1063
      %v1065 = vand.u32 %v1064, 4294901760
      %1066 = vmatpush1.msra.mxu0 %v1065
      %1067 = vmatprep.subr.mxu0 0.0
      %v1068 = vand.u32 %v274, 4294901760
      %v1069 = vsub.f32 %v274, %v1068
      %v1070 = vand.u32 %v1069, 4294901760
      %1071 = vmatpush1.msra.mxu0 %v1070
      %1072 = vmatprep.subr.mxu0 0.0
      %v1073 = vand.u32 %v275, 4294901760
      %v1074 = vsub.f32 %v275, %v1073
      %v1075 = vand.u32 %v1074, 4294901760
      %1076 = vmatpush1.msra.mxu0 %v1075
      %1077 = vmatprep.subr.mxu0 0.0
      %v1078 = vand.u32 %v276, 4294901760
      %v1079 = vsub.f32 %v276, %v1078
      %v1080 = vand.u32 %v1079, 4294901760
      %1081 = vmatpush1.msra.mxu0 %v1080
      %1082 = vmatprep.subr.mxu0 0.0
      %v1083 = vand.u32 %v277, 4294901760
      %v1084 = vsub.f32 %v277, %v1083
      %v1085 = vand.u32 %v1084, 4294901760
      %1086 = vmatpush1.msra.mxu0 %v1085
      %1087 = vmatprep.subr.mxu0 0.0
      %v1088 = vand.u32 %v278, 4294901760
      %v1089 = vsub.f32 %v278, %v1088
      %v1090 = vand.u32 %v1089, 4294901760
      %1091 = vmatpush1.msra.mxu0 %v1090
      %1092 = vmatprep.subr.mxu0 0.0
      %v1093 = vand.u32 %v279, 4294901760
      %v1094 = vsub.f32 %v279, %v1093
      %v1095 = vand.u32 %v1094, 4294901760
      %1096 = vmatpush1.msra.mxu0 %v1095
      %1097 = vmatprep.subr.mxu0 0.0
      %v1098 = vand.u32 %v280, 4294901760
      %v1099 = vsub.f32 %v280, %v1098
      %v1100 = vand.u32 %v1099, 4294901760
      %1101 = vmatpush1.msra.mxu0 %v1100
      %1102 = vmatprep.subr.mxu0 0.0
      %v1103 = vand.u32 %v281, 4294901760
      %v1104 = vsub.f32 %v281, %v1103
      %v1105 = vand.u32 %v1104, 4294901760
      %1106 = vmatpush1.msra.mxu0 %v1105
      %1107 = vmatprep.subr.mxu0 0.0
      %v1108 = vand.u32 %v282, 4294901760
      %v1109 = vsub.f32 %v282, %v1108
      %v1110 = vand.u32 %v1109, 4294901760
      %1111 = vmatpush1.msra.mxu0 %v1110
      %1112 = vmatprep.subr.mxu0 0.0
      %v1113 = vand.u32 %v283, 4294901760
      %v1114 = vsub.f32 %v283, %v1113
      %v1115 = vand.u32 %v1114, 4294901760
      %1116 = vmatpush1.msra.mxu0 %v1115
      %1117 = vmatprep.subr.mxu0 0.0
      %v1118 = vand.u32 %v284, 4294901760
      %v1119 = vsub.f32 %v284, %v1118
      %v1120 = vand.u32 %v1119, 4294901760
      %1121 = vmatpush1.msra.mxu0 %v1120
      %1122 = vmatprep.subr.mxu0 0.0
      %v1123 = vand.u32 %v285, 4294901760
      %v1124 = vsub.f32 %v285, %v1123
      %v1125 = vand.u32 %v1124, 4294901760
      %1126 = vmatpush1.msra.mxu0 %v1125
      %1127 = vmatprep.subr.mxu0 0.0
      %v1128 = vand.u32 %v286, 4294901760
      %v1129 = vsub.f32 %v286, %v1128
      %v1130 = vand.u32 %v1129, 4294901760
      %1131 = vmatpush1.msra.mxu0 %v1130
      %1132 = vmatprep.subr.mxu0 0.0
      %v1133 = vand.u32 %v287, 4294901760
      %v1134 = vsub.f32 %v287, %v1133
      %v1135 = vand.u32 %v1134, 4294901760
      %1136 = vmatpush1.msra.mxu0 %v1135
      %1137 = vmatprep.subr.mxu0 0.0
      %v1138 = vand.u32 %v288, 4294901760
      %v1139 = vsub.f32 %v288, %v1138
      %v1140 = vand.u32 %v1139, 4294901760
      %1141 = vmatpush1.msra.mxu0 %v1140
      %1142 = vmatprep.subr.mxu0 0.0
      %v1143 = vand.u32 %v289, 4294901760
      %v1144 = vsub.f32 %v289, %v1143
      %v1145 = vand.u32 %v1144, 4294901760
      %1146 = vmatpush1.msra.mxu0 %v1145
      %1147 = vmatprep.subr.mxu0 0.0
      %v1148 = vand.u32 %v290, 4294901760
      %v1149 = vsub.f32 %v290, %v1148
      %v1150 = vand.u32 %v1149, 4294901760
      %1151 = vmatpush1.msra.mxu0 %v1150
      %1152 = vmatprep.subr.mxu0 0.0
      %v1153 = vand.u32 %v291, 4294901760
      %v1154 = vsub.f32 %v291, %v1153
      %v1155 = vand.u32 %v1154, 4294901760
      %1156 = vmatpush1.msra.mxu0 %v1155
      %v1157 = vand.u32 %v249, 4294901760
      %1158 = vmatprep.mubr.f32.mxu0 %v1157
      %v1159 = vand.u32 %v248, 4294901760
      %1160 = vmatmul.mubr.f32.gmra.mrb[0].mxu0 %v1159
      %v1161 = vpop.f32.mrb[0].mxu0
      %v1162 = vadd.f32 %v972, %v1161
      %v1163 = vpop.f32.mrb[0].mxu0
      %v1164 = vand.u32 %v252, 4294901760
      %1165 = vmatprep.mubr.f32.mxu0 %v1164
      %v1166 = vand.u32 %v251, 4294901760
      %1167 = vmatmul.mubr.f32.gmra.mrb[0].mxu0 %v1166
      %v1168 = vpop.f32.mrb[0].mxu0
      %v1169 = vadd.f32 %v983, %v1168
      %v1170 = vpop.f32.mrb[0].mxu0
      %v1171 = vand.u32 %v255, 4294901760
      %1172 = vmatprep.mubr.f32.mxu0 %v1171
      %v1173 = vand.u32 %v254, 4294901760
      %1174 = vmatmul.mubr.f32.gmra.mrb[0].mxu0 %v1173
      %v1175 = vpop.f32.mrb[0].mxu0
      %v1176 = vadd.f32 %v994, %v1175
      %v1177 = vpop.f32.mrb[0].mxu0
      %1178 = vdwg.mxu0
      %1179 = vmatprep.subr.mxu0 0.0
      %v1180 = vand.u32 %v260, 4294901760
      %1181 = vmatpush1.msra.mxu0 %v1180
      %1182 = vmatprep.subr.mxu0 0.0
      %v1183 = vand.u32 %v261, 4294901760
      %1184 = vmatpush1.msra.mxu0 %v1183
      %1185 = vmatprep.subr.mxu0 0.0
      %v1186 = vand.u32 %v262, 4294901760
      %1187 = vmatpush1.msra.mxu0 %v1186
      %1188 = vmatprep.subr.mxu0 0.0
      %v1189 = vand.u32 %v263, 4294901760
      %1190 = vmatpush1.msra.mxu0 %v1189
      %1191 = vmatprep.subr.mxu0 0.0
      %v1192 = vand.u32 %v264, 4294901760
      %1193 = vmatpush1.msra.mxu0 %v1192
      %1194 = vmatprep.subr.mxu0 0.0
      %v1195 = vand.u32 %v265, 4294901760
      %1196 = vmatpush1.msra.mxu0 %v1195
      %1197 = vmatprep.subr.mxu0 0.0
      %v1198 = vand.u32 %v266, 4294901760
      %1199 = vmatpush1.msra.mxu0 %v1198
      %1200 = vmatprep.subr.mxu0 0.0
      %v1201 = vand.u32 %v267, 4294901760
      %1202 = vmatpush1.msra.mxu0 %v1201
      %1203 = vmatprep.subr.mxu0 0.0
      %v1204 = vand.u32 %v268, 4294901760
      %1205 = vmatpush1.msra.mxu0 %v1204
      %1206 = vmatprep.subr.mxu0 0.0
      %v1207 = vand.u32 %v269, 4294901760
      %1208 = vmatpush1.msra.mxu0 %v1207
      %1209 = vmatprep.subr.mxu0 0.0
      %v1210 = vand.u32 %v270, 4294901760
      %1211 = vmatpush1.msra.mxu0 %v1210
      %1212 = vmatprep.subr.mxu0 0.0
      %v1213 = vand.u32 %v271, 4294901760
      %1214 = vmatpush1.msra.mxu0 %v1213
      %1215 = vmatprep.subr.mxu0 0.0
      %v1216 = vand.u32 %v272, 4294901760
      %1217 = vmatpush1.msra.mxu0 %v1216
      %1218 = vmatprep.subr.mxu0 0.0
      %v1219 = vand.u32 %v273, 4294901760
      %1220 = vmatpush1.msra.mxu0 %v1219
      %1221 = vmatprep.subr.mxu0 0.0
      %v1222 = vand.u32 %v274, 4294901760
      %1223 = vmatpush1.msra.mxu0 %v1222
      %1224 = vmatprep.subr.mxu0 0.0
      %v1225 = vand.u32 %v275, 4294901760
      %1226 = vmatpush1.msra.mxu0 %v1225
      %1227 = vmatprep.subr.mxu0 0.0
      %v1228 = vand.u32 %v276, 4294901760
      %1229 = vmatpush1.msra.mxu0 %v1228
      %1230 = vmatprep.subr.mxu0 0.0
      %v1231 = vand.u32 %v277, 4294901760
      %1232 = vmatpush1.msra.mxu0 %v1231
      %1233 = vmatprep.subr.mxu0 0.0
      %v1234 = vand.u32 %v278, 4294901760
      %1235 = vmatpush1.msra.mxu0 %v1234
      %1236 = vmatprep.subr.mxu0 0.0
      %v1237 = vand.u32 %v279, 4294901760
      %1238 = vmatpush1.msra.mxu0 %v1237
      %1239 = vmatprep.subr.mxu0 0.0
      %v1240 = vand.u32 %v280, 4294901760
      %1241 = vmatpush1.msra.mxu0 %v1240
      %1242 = vmatprep.subr.mxu0 0.0
      %v1243 = vand.u32 %v281, 4294901760
      %1244 = vmatpush1.msra.mxu0 %v1243
      %1245 = vmatprep.subr.mxu0 0.0
      %v1246 = vand.u32 %v282, 4294901760
      %1247 = vmatpush1.msra.mxu0 %v1246
      %1248 = vmatprep.subr.mxu0 0.0
      %v1249 = vand.u32 %v283, 4294901760
      %1250 = vmatpush1.msra.mxu0 %v1249
      %1251 = vmatprep.subr.mxu0 0.0
      %v1252 = vand.u32 %v284, 4294901760
      %1253 = vmatpush1.msra.mxu0 %v1252
      %1254 = vmatprep.subr.mxu0 0.0
      %v1255 = vand.u32 %v285, 4294901760
      %1256 = vmatpush1.msra.mxu0 %v1255
      %1257 = vmatprep.subr.mxu0 0.0
      %v1258 = vand.u32 %v286, 4294901760
      %1259 = vmatpush1.msra.mxu0 %v1258
      %1260 = vmatprep.subr.mxu0 0.0
      %v1261 = vand.u32 %v287, 4294901760
      %1262 = vmatpush1.msra.mxu0 %v1261
      %1263 = vmatprep.subr.mxu0 0.0
      %v1264 = vand.u32 %v288, 4294901760
      %1265 = vmatpush1.msra.mxu0 %v1264
      %1266 = vmatprep.subr.mxu0 0.0
      %v1267 = vand.u32 %v289, 4294901760
      %1268 = vmatpush1.msra.mxu0 %v1267
      %1269 = vmatprep.subr.mxu0 0.0
      %v1270 = vand.u32 %v290, 4294901760
      %1271 = vmatpush1.msra.mxu0 %v1270
      %1272 = vmatprep.subr.mxu0 0.0
      %v1273 = vand.u32 %v291, 4294901760
      %1274 = vmatpush1.msra.mxu0 %v1273
      %v1275 = vand.u32 %v249, 4294901760
      %1276 = vmatprep.mubr.f32.mxu0 %v1275
      %v1277 = vand.u32 %v248, 4294901760
      %1278 = vmatmul.mubr.f32.gmra.mrb[0].mxu0 %v1277
      %v1279 = vpop.f32.mrb[0].mxu0
      %v1280 = vadd.f32 %v1162, %v1279
      %v1281 = vpop.f32.mrb[0].mxu0
      %v1282 = vand.u32 %v252, 4294901760
      %1283 = vmatprep.mubr.f32.mxu0 %v1282
      %v1284 = vand.u32 %v251, 4294901760
      %1285 = vmatmul.mubr.f32.gmra.mrb[0].mxu0 %v1284
      %v1286 = vpop.f32.mrb[0].mxu0
      %v1287 = vadd.f32 %v1169, %v1286
      %v1288 = vpop.f32.mrb[0].mxu0
      %v1289 = vand.u32 %v255, 4294901760
      %1290 = vmatprep.mubr.f32.mxu0 %v1289
      %v1291 = vand.u32 %v254, 4294901760
      %1292 = vmatmul.mubr.f32.gmra.mrb[0].mxu0 %v1291
      %v1293 = vpop.f32.mrb[0].mxu0
      %v1294 = vadd.f32 %v1176, %v1293
      %v1295 = vpop.f32.mrb[0].mxu0
      %1296 = vdwg.mxu0
      %1297 = vmatprep.subr.mxu0 0.0
      %v1298 = vand.u32 %v292, 4294901760
      %1299 = vmatpush1.msra.mxu0 %v1298
      %1300 = vmatprep.subr.mxu0 0.0
      %v1301 = vand.u32 %v293, 4294901760
      %1302 = vmatpush1.msra.mxu0 %v1301
      %1303 = vmatprep.subr.mxu0 0.0
      %v1304 = vand.u32 %v294, 4294901760
      %1305 = vmatpush1.msra.mxu0 %v1304
      %1306 = vmatprep.subr.mxu0 0.0
      %v1307 = vand.u32 %v295, 4294901760
      %1308 = vmatpush1.msra.mxu0 %v1307
      %1309 = vmatprep.subr.mxu0 0.0
      %v1310 = vand.u32 %v296, 4294901760
      %1311 = vmatpush1.msra.mxu0 %v1310
      %1312 = vmatprep.subr.mxu0 0.0
      %v1313 = vand.u32 %v297, 4294901760
      %1314 = vmatpush1.msra.mxu0 %v1313
      %1315 = vmatprep.subr.mxu0 0.0
      %v1316 = vand.u32 %v298, 4294901760
      %1317 = vmatpush1.msra.mxu0 %v1316
      %1318 = vmatprep.subr.mxu0 0.0
      %v1319 = vand.u32 %v299, 4294901760
      %1320 = vmatpush1.msra.mxu0 %v1319
      %1321 = vmatprep.subr.mxu0 0.0
      %v1322 = vand.u32 %v300, 4294901760
      %1323 = vmatpush1.msra.mxu0 %v1322
      %1324 = vmatprep.subr.mxu0 0.0
      %v1325 = vand.u32 %v301, 4294901760
      %1326 = vmatpush1.msra.mxu0 %v1325
      %1327 = vmatprep.subr.mxu0 0.0
      %v1328 = vand.u32 %v302, 4294901760
      %1329 = vmatpush1.msra.mxu0 %v1328
      %1330 = vmatprep.subr.mxu0 0.0
      %v1331 = vand.u32 %v303, 4294901760
      %1332 = vmatpush1.msra.mxu0 %v1331
      %1333 = vmatprep.subr.mxu0 0.0
      %v1334 = vand.u32 %v304, 4294901760
      %1335 = vmatpush1.msra.mxu0 %v1334
      %1336 = vmatprep.subr.mxu0 0.0
      %v1337 = vand.u32 %v305, 4294901760
      %1338 = vmatpush1.msra.mxu0 %v1337
      %1339 = vmatprep.subr.mxu0 0.0
      %v1340 = vand.u32 %v306, 4294901760
      %1341 = vmatpush1.msra.mxu0 %v1340
      %1342 = vmatprep.subr.mxu0 0.0
      %v1343 = vand.u32 %v307, 4294901760
      %1344 = vmatpush1.msra.mxu0 %v1343
      %1345 = vmatprep.subr.mxu0 0.0
      %1346 = vmatpush1.msra.mxu0 0.0
      %1347 = vmatprep.subr.mxu0 0.0
      %1348 = vmatpush1.msra.mxu0 0.0
      %1349 = vmatprep.subr.mxu0 0.0
      %1350 = vmatpush1.msra.mxu0 0.0
      %1351 = vmatprep.subr.mxu0 0.0
      %1352 = vmatpush1.msra.mxu0 0.0
      %1353 = vmatprep.subr.mxu0 0.0
      %1354 = vmatpush1.msra.mxu0 0.0
      %1355 = vmatprep.subr.mxu0 0.0
      %1356 = vmatpush1.msra.mxu0 0.0
      %1357 = vmatprep.subr.mxu0 0.0
      %1358 = vmatpush1.msra.mxu0 0.0
      %1359 = vmatprep.subr.mxu0 0.0
      %1360 = vmatpush1.msra.mxu0 0.0
      %1361 = vmatprep.subr.mxu0 0.0
      %1362 = vmatpush1.msra.mxu0 0.0
      %1363 = vmatprep.subr.mxu0 0.0
      %1364 = vmatpush1.msra.mxu0 0.0
      %1365 = vmatprep.subr.mxu0 0.0
      %1366 = vmatpush1.msra.mxu0 0.0
      %1367 = vmatprep.subr.mxu0 0.0
      %1368 = vmatpush1.msra.mxu0 0.0
      %1369 = vmatprep.subr.mxu0 0.0
      %1370 = vmatpush1.msra.mxu0 0.0
      %1371 = vmatprep.subr.mxu0 0.0
      %1372 = vmatpush1.msra.mxu0 0.0
      %1373 = vmatprep.subr.mxu0 0.0
      %1374 = vmatpush1.msra.mxu0 0.0
      %1375 = vmatprep.subr.mxu0 0.0
      %1376 = vmatpush1.msra.mxu0 0.0
      %1377 = vmatprep.mubr.f32.mxu0 0.0
      %v1378 = vand.u32 %v250, 4294901760
      %v1379 = vsub.f32 %v250, %v1378
      %v1380 = vand.u32 %v1379, 4294901760
      %v1381 = vsub.f32 %v1379, %v1380
      %v1382 = vand.u32 %v1381, 4294901760
      %1383 = vmatmul.mubr.f32.gmra.mrb[0].mxu0 %v1382
      %v1384 = vpop.f32.mrb[0].mxu0
      %v1385 = vadd.f32 %v1280, %v1384
      %v1386 = vpop.f32.mrb[0].mxu0
      %1387 = vmatprep.mubr.f32.mxu0 0.0
      %v1388 = vand.u32 %v253, 4294901760
      %v1389 = vsub.f32 %v253, %v1388
      %v1390 = vand.u32 %v1389, 4294901760
      %v1391 = vsub.f32 %v1389, %v1390
      %v1392 = vand.u32 %v1391, 4294901760
      %1393 = vmatmul.mubr.f32.gmra.mrb[0].mxu0 %v1392
      %v1394 = vpop.f32.mrb[0].mxu0
      %v1395 = vadd.f32 %v1287, %v1394
      %v1396 = vpop.f32.mrb[0].mxu0
      %1397 = vmatprep.mubr.f32.mxu0 0.0
      %v1398 = vand.u32 %v256, 4294901760
      %v1399 = vsub.f32 %v256, %v1398
      %v1400 = vand.u32 %v1399, 4294901760
      %v1401 = vsub.f32 %v1399, %v1400
      %v1402 = vand.u32 %v1401, 4294901760
      %1403 = vmatmul.mubr.f32.gmra.mrb[0].mxu0 %v1402
      %v1404 = vpop.f32.mrb[0].mxu0
      %v1405 = vadd.f32 %v1294, %v1404
      %v1406 = vpop.f32.mrb[0].mxu0
      %1407 = vdwg.mxu0
      %1408 = vmatprep.subr.mxu0 0.0
      %v1409 = vand.u32 %v292, 4294901760
      %v1410 = vsub.f32 %v292, %v1409
      %v1411 = vand.u32 %v1410, 4294901760
      %v1412 = vsub.f32 %v1410, %v1411
      %v1413 = vand.u32 %v1412, 4294901760
      %1414 = vmatpush1.msra.mxu0 %v1413
      %1415 = vmatprep.subr.mxu0 0.0
      %v1416 = vand.u32 %v293, 4294901760
      %v1417 = vsub.f32 %v293, %v1416
      %v1418 = vand.u32 %v1417, 4294901760
      %v1419 = vsub.f32 %v1417, %v1418
      %v1420 = vand.u32 %v1419, 4294901760
      %1421 = vmatpush1.msra.mxu0 %v1420
      %1422 = vmatprep.subr.mxu0 0.0
      %v1423 = vand.u32 %v294, 4294901760
      %v1424 = vsub.f32 %v294, %v1423
      %v1425 = vand.u32 %v1424, 4294901760
      %v1426 = vsub.f32 %v1424, %v1425
      %v1427 = vand.u32 %v1426, 4294901760
      %1428 = vmatpush1.msra.mxu0 %v1427
      %1429 = vmatprep.subr.mxu0 0.0
      %v1430 = vand.u32 %v295, 4294901760
      %v1431 = vsub.f32 %v295, %v1430
      %v1432 = vand.u32 %v1431, 4294901760
      %v1433 = vsub.f32 %v1431, %v1432
      %v1434 = vand.u32 %v1433, 4294901760
      %1435 = vmatpush1.msra.mxu0 %v1434
      %1436 = vmatprep.subr.mxu0 0.0
      %v1437 = vand.u32 %v296, 4294901760
      %v1438 = vsub.f32 %v296, %v1437
      %v1439 = vand.u32 %v1438, 4294901760
      %v1440 = vsub.f32 %v1438, %v1439
      %v1441 = vand.u32 %v1440, 4294901760
      %1442 = vmatpush1.msra.mxu0 %v1441
      %1443 = vmatprep.subr.mxu0 0.0
      %v1444 = vand.u32 %v297, 4294901760
      %v1445 = vsub.f32 %v297, %v1444
      %v1446 = vand.u32 %v1445, 4294901760
      %v1447 = vsub.f32 %v1445, %v1446
      %v1448 = vand.u32 %v1447, 4294901760
      %1449 = vmatpush1.msra.mxu0 %v1448
      %1450 = vmatprep.subr.mxu0 0.0
      %v1451 = vand.u32 %v298, 4294901760
      %v1452 = vsub.f32 %v298, %v1451
      %v1453 = vand.u32 %v1452, 4294901760
      %v1454 = vsub.f32 %v1452, %v1453
      %v1455 = vand.u32 %v1454, 4294901760
      %1456 = vmatpush1.msra.mxu0 %v1455
      %1457 = vmatprep.subr.mxu0 0.0
      %v1458 = vand.u32 %v299, 4294901760
      %v1459 = vsub.f32 %v299, %v1458
      %v1460 = vand.u32 %v1459, 4294901760
      %v1461 = vsub.f32 %v1459, %v1460
      %v1462 = vand.u32 %v1461, 4294901760
      %1463 = vmatpush1.msra.mxu0 %v1462
      %1464 = vmatprep.subr.mxu0 0.0
      %v1465 = vand.u32 %v300, 4294901760
      %v1466 = vsub.f32 %v300, %v1465
      %v1467 = vand.u32 %v1466, 4294901760
      %v1468 = vsub.f32 %v1466, %v1467
      %v1469 = vand.u32 %v1468, 4294901760
      %1470 = vmatpush1.msra.mxu0 %v1469
      %1471 = vmatprep.subr.mxu0 0.0
      %v1472 = vand.u32 %v301, 4294901760
      %v1473 = vsub.f32 %v301, %v1472
      %v1474 = vand.u32 %v1473, 4294901760
      %v1475 = vsub.f32 %v1473, %v1474
      %v1476 = vand.u32 %v1475, 4294901760
      %1477 = vmatpush1.msra.mxu0 %v1476
      %1478 = vmatprep.subr.mxu0 0.0
      %v1479 = vand.u32 %v302, 4294901760
      %v1480 = vsub.f32 %v302, %v1479
      %v1481 = vand.u32 %v1480, 4294901760
      %v1482 = vsub.f32 %v1480, %v1481
      %v1483 = vand.u32 %v1482, 4294901760
      %1484 = vmatpush1.msra.mxu0 %v1483
      %1485 = vmatprep.subr.mxu0 0.0
      %v1486 = vand.u32 %v303, 4294901760
      %v1487 = vsub.f32 %v303, %v1486
      %v1488 = vand.u32 %v1487, 4294901760
      %v1489 = vsub.f32 %v1487, %v1488
      %v1490 = vand.u32 %v1489, 4294901760
      %1491 = vmatpush1.msra.mxu0 %v1490
      %1492 = vmatprep.subr.mxu0 0.0
      %v1493 = vand.u32 %v304, 4294901760
      %v1494 = vsub.f32 %v304, %v1493
      %v1495 = vand.u32 %v1494, 4294901760
      %v1496 = vsub.f32 %v1494, %v1495
      %v1497 = vand.u32 %v1496, 4294901760
      %1498 = vmatpush1.msra.mxu0 %v1497
      %1499 = vmatprep.subr.mxu0 0.0
      %v1500 = vand.u32 %v305, 4294901760
      %v1501 = vsub.f32 %v305, %v1500
      %v1502 = vand.u32 %v1501, 4294901760
      %v1503 = vsub.f32 %v1501, %v1502
      %v1504 = vand.u32 %v1503, 4294901760
      %1505 = vmatpush1.msra.mxu0 %v1504
      %1506 = vmatprep.subr.mxu0 0.0
      %v1507 = vand.u32 %v306, 4294901760
      %v1508 = vsub.f32 %v306, %v1507
      %v1509 = vand.u32 %v1508, 4294901760
      %v1510 = vsub.f32 %v1508, %v1509
      %v1511 = vand.u32 %v1510, 4294901760
      %1512 = vmatpush1.msra.mxu0 %v1511
      %1513 = vmatprep.subr.mxu0 0.0
      %v1514 = vand.u32 %v307, 4294901760
      %v1515 = vsub.f32 %v307, %v1514
      %v1516 = vand.u32 %v1515, 4294901760
      %v1517 = vsub.f32 %v1515, %v1516
      %v1518 = vand.u32 %v1517, 4294901760
      %1519 = vmatpush1.msra.mxu0 %v1518
      %1520 = vmatprep.subr.mxu0 0.0
      %1521 = vmatpush1.msra.mxu0 0.0
      %1522 = vmatprep.subr.mxu0 0.0
      %1523 = vmatpush1.msra.mxu0 0.0
      %1524 = vmatprep.subr.mxu0 0.0
      %1525 = vmatpush1.msra.mxu0 0.0
      %1526 = vmatprep.subr.mxu0 0.0
      %1527 = vmatpush1.msra.mxu0 0.0
      %1528 = vmatprep.subr.mxu0 0.0
      %1529 = vmatpush1.msra.mxu0 0.0
      %1530 = vmatprep.subr.mxu0 0.0
      %1531 = vmatpush1.msra.mxu0 0.0
      %1532 = vmatprep.subr.mxu0 0.0
      %1533 = vmatpush1.msra.mxu0 0.0
      %1534 = vmatprep.subr.mxu0 0.0
      %1535 = vmatpush1.msra.mxu0 0.0
      %1536 = vmatprep.subr.mxu0 0.0
      %1537 = vmatpush1.msra.mxu0 0.0
      %1538 = vmatprep.subr.mxu0 0.0
      %1539 = vmatpush1.msra.mxu0 0.0
      %1540 = vmatprep.subr.mxu0 0.0
      %1541 = vmatpush1.msra.mxu0 0.0
      %1542 = vmatprep.subr.mxu0 0.0
      %1543 = vmatpush1.msra.mxu0 0.0
      %1544 = vmatprep.subr.mxu0 0.0
      %1545 = vmatpush1.msra.mxu0 0.0
      %1546 = vmatprep.subr.mxu0 0.0
      %1547 = vmatpush1.msra.mxu0 0.0
      %1548 = vmatprep.subr.mxu0 0.0
      %1549 = vmatpush1.msra.mxu0 0.0
      %1550 = vmatprep.subr.mxu0 0.0
      %1551 = vmatpush1.msra.mxu0 0.0
      %1552 = vmatprep.mubr.f32.mxu0 0.0
      %v1553 = vand.u32 %v250, 4294901760
      %1554 = vmatmul.mubr.f32.gmra.mrb[0].mxu0 %v1553
      %v1555 = vpop.f32.mrb[0].mxu0
      %v1556 = vadd.f32 %v1385, %v1555
      %v1557 = vpop.f32.mrb[0].mxu0
      %1558 = vmatprep.mubr.f32.mxu0 0.0
      %v1559 = vand.u32 %v253, 4294901760
      %1560 = vmatmul.mubr.f32.gmra.mrb[0].mxu0 %v1559
      %v1561 = vpop.f32.mrb[0].mxu0
      %v1562 = vadd.f32 %v1395, %v1561
      %v1563 = vpop.f32.mrb[0].mxu0
      %1564 = vmatprep.mubr.f32.mxu0 0.0
      %v1565 = vand.u32 %v256, 4294901760
      %1566 = vmatmul.mubr.f32.gmra.mrb[0].mxu0 %v1565
      %v1567 = vpop.f32.mrb[0].mxu0
      %v1568 = vadd.f32 %v1405, %v1567
      %v1569 = vpop.f32.mrb[0].mxu0
      %1570 = vdwg.mxu0
      %1571 = vmatprep.subr.mxu0 0.0
      %v1572 = vand.u32 %v292, 4294901760
      %v1573 = vsub.f32 %v292, %v1572
      %1574 = vmatpush1.msra.mxu0 %v1573
      %1575 = vmatprep.subr.mxu0 0.0
      %v1576 = vand.u32 %v293, 4294901760
      %v1577 = vsub.f32 %v293, %v1576
      %1578 = vmatpush1.msra.mxu0 %v1577
      %1579 = vmatprep.subr.mxu0 0.0
      %v1580 = vand.u32 %v294, 4294901760
      %v1581 = vsub.f32 %v294, %v1580
      %1582 = vmatpush1.msra.mxu0 %v1581
      %1583 = vmatprep.subr.mxu0 0.0
      %v1584 = vand.u32 %v295, 4294901760
      %v1585 = vsub.f32 %v295, %v1584
      %1586 = vmatpush1.msra.mxu0 %v1585
      %1587 = vmatprep.subr.mxu0 0.0
      %v1588 = vand.u32 %v296, 4294901760
      %v1589 = vsub.f32 %v296, %v1588
      %1590 = vmatpush1.msra.mxu0 %v1589
      %1591 = vmatprep.subr.mxu0 0.0
      %v1592 = vand.u32 %v297, 4294901760
      %v1593 = vsub.f32 %v297, %v1592
      %1594 = vmatpush1.msra.mxu0 %v1593
      %1595 = vmatprep.subr.mxu0 0.0
      %v1596 = vand.u32 %v298, 4294901760
      %v1597 = vsub.f32 %v298, %v1596
      %1598 = vmatpush1.msra.mxu0 %v1597
      %1599 = vmatprep.subr.mxu0 0.0
      %v1600 = vand.u32 %v299, 4294901760
      %v1601 = vsub.f32 %v299, %v1600
      %1602 = vmatpush1.msra.mxu0 %v1601
      %1603 = vmatprep.subr.mxu0 0.0
      %v1604 = vand.u32 %v300, 4294901760
      %v1605 = vsub.f32 %v300, %v1604
      %1606 = vmatpush1.msra.mxu0 %v1605
      %1607 = vmatprep.subr.mxu0 0.0
      %v1608 = vand.u32 %v301, 4294901760
      %v1609 = vsub.f32 %v301, %v1608
      %1610 = vmatpush1.msra.mxu0 %v1609
      %1611 = vmatprep.subr.mxu0 0.0
      %v1612 = vand.u32 %v302, 4294901760
      %v1613 = vsub.f32 %v302, %v1612
      %1614 = vmatpush1.msra.mxu0 %v1613
      %1615 = vmatprep.subr.mxu0 0.0
      %v1616 = vand.u32 %v303, 4294901760
      %v1617 = vsub.f32 %v303, %v1616
      %1618 = vmatpush1.msra.mxu0 %v1617
      %1619 = vmatprep.subr.mxu0 0.0
      %v1620 = vand.u32 %v304, 4294901760
      %v1621 = vsub.f32 %v304, %v1620
      %1622 = vmatpush1.msra.mxu0 %v1621
      %1623 = vmatprep.subr.mxu0 0.0
      %v1624 = vand.u32 %v305, 4294901760
      %v1625 = vsub.f32 %v305, %v1624
      %1626 = vmatpush1.msra.mxu0 %v1625
      %1627 = vmatprep.subr.mxu0 0.0
      %v1628 = vand.u32 %v306, 4294901760
      %v1629 = vsub.f32 %v306, %v1628
      %1630 = vmatpush1.msra.mxu0 %v1629
      %1631 = vmatprep.subr.mxu0 0.0
      %v1632 = vand.u32 %v307, 4294901760
      %v1633 = vsub.f32 %v307, %v1632
      %1634 = vmatpush1.msra.mxu0 %v1633
      %1635 = vmatprep.subr.mxu0 0.0
      %1636 = vmatpush1.msra.mxu0 0.0
      %1637 = vmatprep.subr.mxu0 0.0
      %1638 = vmatpush1.msra.mxu0 0.0
      %1639 = vmatprep.subr.mxu0 0.0
      %1640 = vmatpush1.msra.mxu0 0.0
      %1641 = vmatprep.subr.mxu0 0.0
      %1642 = vmatpush1.msra.mxu0 0.0
      %1643 = vmatprep.subr.mxu0 0.0
      %1644 = vmatpush1.msra.mxu0 0.0
      %1645 = vmatprep.subr.mxu0 0.0
      %1646 = vmatpush1.msra.mxu0 0.0
      %1647 = vmatprep.subr.mxu0 0.0
      %1648 = vmatpush1.msra.mxu0 0.0
      %1649 = vmatprep.subr.mxu0 0.0
      %1650 = vmatpush1.msra.mxu0 0.0
      %1651 = vmatprep.subr.mxu0 0.0
      %1652 = vmatpush1.msra.mxu0 0.0
      %1653 = vmatprep.subr.mxu0 0.0
      %1654 = vmatpush1.msra.mxu0 0.0
      %1655 = vmatprep.subr.mxu0 0.0
      %1656 = vmatpush1.msra.mxu0 0.0
      %1657 = vmatprep.subr.mxu0 0.0
      %1658 = vmatpush1.msra.mxu0 0.0
      %1659 = vmatprep.subr.mxu0 0.0
      %1660 = vmatpush1.msra.mxu0 0.0
      %1661 = vmatprep.subr.mxu0 0.0
      %1662 = vmatpush1.msra.mxu0 0.0
      %1663 = vmatprep.subr.mxu0 0.0
      %1664 = vmatpush1.msra.mxu0 0.0
      %1665 = vmatprep.subr.mxu0 0.0
      %1666 = vmatpush1.msra.mxu0 0.0
      %1667 = vmatprep.mubr.f32.mxu0 0.0
      %v1668 = vand.u32 %v250, 4294901760
      %v1669 = vsub.f32 %v250, %v1668
      %1670 = vmatmul.mubr.f32.gmra.mrb[0].mxu0 %v1669
      %v1671 = vpop.f32.mrb[0].mxu0
      %v1672 = vadd.f32 %v1556, %v1671
      %v1673 = vpop.f32.mrb[0].mxu0
      %1674 = vmatprep.mubr.f32.mxu0 0.0
      %v1675 = vand.u32 %v253, 4294901760
      %v1676 = vsub.f32 %v253, %v1675
      %1677 = vmatmul.mubr.f32.gmra.mrb[0].mxu0 %v1676
      %v1678 = vpop.f32.mrb[0].mxu0
      %v1679 = vadd.f32 %v1562, %v1678
      %v1680 = vpop.f32.mrb[0].mxu0
      %1681 = vmatprep.mubr.f32.mxu0 0.0
      %v1682 = vand.u32 %v256, 4294901760
      %v1683 = vsub.f32 %v256, %v1682
      %1684 = vmatmul.mubr.f32.gmra.mrb[0].mxu0 %v1683
      %v1685 = vpop.f32.mrb[0].mxu0
      %v1686 = vadd.f32 %v1568, %v1685
      %v1687 = vpop.f32.mrb[0].mxu0
      %1688 = vdwg.mxu0
      %1689 = vmatprep.subr.mxu0 0.0
      %v1690 = vand.u32 %v292, 4294901760
      %1691 = vmatpush1.msra.mxu0 %v1690
      %1692 = vmatprep.subr.mxu0 0.0
      %v1693 = vand.u32 %v293, 4294901760
      %1694 = vmatpush1.msra.mxu0 %v1693
      %1695 = vmatprep.subr.mxu0 0.0
      %v1696 = vand.u32 %v294, 4294901760
      %1697 = vmatpush1.msra.mxu0 %v1696
      %1698 = vmatprep.subr.mxu0 0.0
      %v1699 = vand.u32 %v295, 4294901760
      %1700 = vmatpush1.msra.mxu0 %v1699
      %1701 = vmatprep.subr.mxu0 0.0
      %v1702 = vand.u32 %v296, 4294901760
      %1703 = vmatpush1.msra.mxu0 %v1702
      %1704 = vmatprep.subr.mxu0 0.0
      %v1705 = vand.u32 %v297, 4294901760
      %1706 = vmatpush1.msra.mxu0 %v1705
      %1707 = vmatprep.subr.mxu0 0.0
      %v1708 = vand.u32 %v298, 4294901760
      %1709 = vmatpush1.msra.mxu0 %v1708
      %1710 = vmatprep.subr.mxu0 0.0
      %v1711 = vand.u32 %v299, 4294901760
      %1712 = vmatpush1.msra.mxu0 %v1711
      %1713 = vmatprep.subr.mxu0 0.0
      %v1714 = vand.u32 %v300, 4294901760
      %1715 = vmatpush1.msra.mxu0 %v1714
      %1716 = vmatprep.subr.mxu0 0.0
      %v1717 = vand.u32 %v301, 4294901760
      %1718 = vmatpush1.msra.mxu0 %v1717
      %1719 = vmatprep.subr.mxu0 0.0
      %v1720 = vand.u32 %v302, 4294901760
      %1721 = vmatpush1.msra.mxu0 %v1720
      %1722 = vmatprep.subr.mxu0 0.0
      %v1723 = vand.u32 %v303, 4294901760
      %1724 = vmatpush1.msra.mxu0 %v1723
      %1725 = vmatprep.subr.mxu0 0.0
      %v1726 = vand.u32 %v304, 4294901760
      %1727 = vmatpush1.msra.mxu0 %v1726
      %1728 = vmatprep.subr.mxu0 0.0
      %v1729 = vand.u32 %v305, 4294901760
      %1730 = vmatpush1.msra.mxu0 %v1729
      %1731 = vmatprep.subr.mxu0 0.0
      %v1732 = vand.u32 %v306, 4294901760
      %1733 = vmatpush1.msra.mxu0 %v1732
      %1734 = vmatprep.subr.mxu0 0.0
      %v1735 = vand.u32 %v307, 4294901760
      %1736 = vmatpush1.msra.mxu0 %v1735
      %1737 = vmatprep.subr.mxu0 0.0
      %1738 = vmatpush1.msra.mxu0 0.0
      %1739 = vmatprep.subr.mxu0 0.0
      %1740 = vmatpush1.msra.mxu0 0.0
      %1741 = vmatprep.subr.mxu0 0.0
      %1742 = vmatpush1.msra.mxu0 0.0
      %1743 = vmatprep.subr.mxu0 0.0
      %1744 = vmatpush1.msra.mxu0 0.0
      %1745 = vmatprep.subr.mxu0 0.0
      %1746 = vmatpush1.msra.mxu0 0.0
      %1747 = vmatprep.subr.mxu0 0.0
      %1748 = vmatpush1.msra.mxu0 0.0
      %1749 = vmatprep.subr.mxu0 0.0
      %1750 = vmatpush1.msra.mxu0 0.0
      %1751 = vmatprep.subr.mxu0 0.0
      %1752 = vmatpush1.msra.mxu0 0.0
      %1753 = vmatprep.subr.mxu0 0.0
      %1754 = vmatpush1.msra.mxu0 0.0
      %1755 = vmatprep.subr.mxu0 0.0
      %1756 = vmatpush1.msra.mxu0 0.0
      %1757 = vmatprep.subr.mxu0 0.0
      %1758 = vmatpush1.msra.mxu0 0.0
      %1759 = vmatprep.subr.mxu0 0.0
      %1760 = vmatpush1.msra.mxu0 0.0
      %1761 = vmatprep.subr.mxu0 0.0
      %1762 = vmatpush1.msra.mxu0 0.0
      %1763 = vmatprep.subr.mxu0 0.0
      %1764 = vmatpush1.msra.mxu0 0.0
      %1765 = vmatprep.subr.mxu0 0.0
      %1766 = vmatpush1.msra.mxu0 0.0
      %1767 = vmatprep.subr.mxu0 0.0
      %1768 = vmatpush1.msra.mxu0 0.0
      %1769 = vmatprep.mubr.f32.mxu0 0.0
      %v1770 = vand.u32 %v250, 4294901760
      %v1771 = vsub.f32 %v250, %v1770
      %v1772 = vand.u32 %v1771, 4294901760
      %1773 = vmatmul.mubr.f32.gmra.mrb[0].mxu0 %v1772
      %v1774 = vpop.f32.mrb[0].mxu0
      %v1775 = vadd.f32 %v1672, %v1774
      %v1776 = vpop.f32.mrb[0].mxu0
      %1777 = vmatprep.mubr.f32.mxu0 0.0
      %v1778 = vand.u32 %v253, 4294901760
      %v1779 = vsub.f32 %v253, %v1778
      %v1780 = vand.u32 %v1779, 4294901760
      %1781 = vmatmul.mubr.f32.gmra.mrb[0].mxu0 %v1780
      %v1782 = vpop.f32.mrb[0].mxu0
      %v1783 = vadd.f32 %v1679, %v1782
      %v1784 = vpop.f32.mrb[0].mxu0
      %1785 = vmatprep.mubr.f32.mxu0 0.0
      %v1786 = vand.u32 %v256, 4294901760
      %v1787 = vsub.f32 %v256, %v1786
      %v1788 = vand.u32 %v1787, 4294901760
      %1789 = vmatmul.mubr.f32.gmra.mrb[0].mxu0 %v1788
      %v1790 = vpop.f32.mrb[0].mxu0
      %v1791 = vadd.f32 %v1686, %v1790
      %v1792 = vpop.f32.mrb[0].mxu0
      %1793 = vdwg.mxu0
      %1794 = vmatprep.subr.mxu0 0.0
      %v1795 = vand.u32 %v292, 4294901760
      %v1796 = vsub.f32 %v292, %v1795
      %v1797 = vand.u32 %v1796, 4294901760
      %1798 = vmatpush1.msra.mxu0 %v1797
      %1799 = vmatprep.subr.mxu0 0.0
      %v1800 = vand.u32 %v293, 4294901760
      %v1801 = vsub.f32 %v293, %v1800
      %v1802 = vand.u32 %v1801, 4294901760
      %1803 = vmatpush1.msra.mxu0 %v1802
      %1804 = vmatprep.subr.mxu0 0.0
      %v1805 = vand.u32 %v294, 4294901760
      %v1806 = vsub.f32 %v294, %v1805
      %v1807 = vand.u32 %v1806, 4294901760
      %1808 = vmatpush1.msra.mxu0 %v1807
      %1809 = vmatprep.subr.mxu0 0.0
      %v1810 = vand.u32 %v295, 4294901760
      %v1811 = vsub.f32 %v295, %v1810
      %v1812 = vand.u32 %v1811, 4294901760
      %1813 = vmatpush1.msra.mxu0 %v1812
      %1814 = vmatprep.subr.mxu0 0.0
      %v1815 = vand.u32 %v296, 4294901760
      %v1816 = vsub.f32 %v296, %v1815
      %v1817 = vand.u32 %v1816, 4294901760
      %1818 = vmatpush1.msra.mxu0 %v1817
      %1819 = vmatprep.subr.mxu0 0.0
      %v1820 = vand.u32 %v297, 4294901760
      %v1821 = vsub.f32 %v297, %v1820
      %v1822 = vand.u32 %v1821, 4294901760
      %1823 = vmatpush1.msra.mxu0 %v1822
      %1824 = vmatprep.subr.mxu0 0.0
      %v1825 = vand.u32 %v298, 4294901760
      %v1826 = vsub.f32 %v298, %v1825
      %v1827 = vand.u32 %v1826, 4294901760
      %1828 = vmatpush1.msra.mxu0 %v1827
      %1829 = vmatprep.subr.mxu0 0.0
      %v1830 = vand.u32 %v299, 4294901760
      %v1831 = vsub.f32 %v299, %v1830
      %v1832 = vand.u32 %v1831, 4294901760
      %1833 = vmatpush1.msra.mxu0 %v1832
      %1834 = vmatprep.subr.mxu0 0.0
      %v1835 = vand.u32 %v300, 4294901760
      %v1836 = vsub.f32 %v300, %v1835
      %v1837 = vand.u32 %v1836, 4294901760
      %1838 = vmatpush1.msra.mxu0 %v1837
      %1839 = vmatprep.subr.mxu0 0.0
      %v1840 = vand.u32 %v301, 4294901760
      %v1841 = vsub.f32 %v301, %v1840
      %v1842 = vand.u32 %v1841, 4294901760
      %1843 = vmatpush1.msra.mxu0 %v1842
      %1844 = vmatprep.subr.mxu0 0.0
      %v1845 = vand.u32 %v302, 4294901760
      %v1846 = vsub.f32 %v302, %v1845
      %v1847 = vand.u32 %v1846, 4294901760
      %1848 = vmatpush1.msra.mxu0 %v1847
      %1849 = vmatprep.subr.mxu0 0.0
      %v1850 = vand.u32 %v303, 4294901760
      %v1851 = vsub.f32 %v303, %v1850
      %v1852 = vand.u32 %v1851, 4294901760
      %1853 = vmatpush1.msra.mxu0 %v1852
      %1854 = vmatprep.subr.mxu0 0.0
      %v1855 = vand.u32 %v304, 4294901760
      %v1856 = vsub.f32 %v304, %v1855
      %v1857 = vand.u32 %v1856, 4294901760
      %1858 = vmatpush1.msra.mxu0 %v1857
      %1859 = vmatprep.subr.mxu0 0.0
      %v1860 = vand.u32 %v305, 4294901760
      %v1861 = vsub.f32 %v305, %v1860
      %v1862 = vand.u32 %v1861, 4294901760
      %1863 = vmatpush1.msra.mxu0 %v1862
      %1864 = vmatprep.subr.mxu0 0.0
      %v1865 = vand.u32 %v306, 4294901760
      %v1866 = vsub.f32 %v306, %v1865
      %v1867 = vand.u32 %v1866, 4294901760
      %1868 = vmatpush1.msra.mxu0 %v1867
      %1869 = vmatprep.subr.mxu0 0.0
      %v1870 = vand.u32 %v307, 4294901760
      %v1871 = vsub.f32 %v307, %v1870
      %v1872 = vand.u32 %v1871, 4294901760
      %1873 = vmatpush1.msra.mxu0 %v1872
      %1874 = vmatprep.subr.mxu0 0.0
      %1875 = vmatpush1.msra.mxu0 0.0
      %1876 = vmatprep.subr.mxu0 0.0
      %1877 = vmatpush1.msra.mxu0 0.0
      %1878 = vmatprep.subr.mxu0 0.0
      %1879 = vmatpush1.msra.mxu0 0.0
      %1880 = vmatprep.subr.mxu0 0.0
      %1881 = vmatpush1.msra.mxu0 0.0
      %1882 = vmatprep.subr.mxu0 0.0
      %1883 = vmatpush1.msra.mxu0 0.0
      %1884 = vmatprep.subr.mxu0 0.0
      %1885 = vmatpush1.msra.mxu0 0.0
      %1886 = vmatprep.subr.mxu0 0.0
      %1887 = vmatpush1.msra.mxu0 0.0
      %1888 = vmatprep.subr.mxu0 0.0
      %1889 = vmatpush1.msra.mxu0 0.0
      %1890 = vmatprep.subr.mxu0 0.0
      %1891 = vmatpush1.msra.mxu0 0.0
      %1892 = vmatprep.subr.mxu0 0.0
      %1893 = vmatpush1.msra.mxu0 0.0
      %1894 = vmatprep.subr.mxu0 0.0
      %1895 = vmatpush1.msra.mxu0 0.0
      %1896 = vmatprep.subr.mxu0 0.0
      %1897 = vmatpush1.msra.mxu0 0.0
      %1898 = vmatprep.subr.mxu0 0.0
      %1899 = vmatpush1.msra.mxu0 0.0
      %1900 = vmatprep.subr.mxu0 0.0
      %1901 = vmatpush1.msra.mxu0 0.0
      %1902 = vmatprep.subr.mxu0 0.0
      %1903 = vmatpush1.msra.mxu0 0.0
      %1904 = vmatprep.subr.mxu0 0.0
      %1905 = vmatpush1.msra.mxu0 0.0
      %1906 = vmatprep.mubr.f32.mxu0 0.0
      %v1907 = vand.u32 %v250, 4294901760
      %1908 = vmatmul.mubr.f32.gmra.mrb[0].mxu0 %v1907
      %v1909 = vpop.f32.mrb[0].mxu0
      %v1910 = vadd.f32 %v1775, %v1909
      %v1911 = vpop.f32.mrb[0].mxu0
      %1912 = vmatprep.mubr.f32.mxu0 0.0
      %v1913 = vand.u32 %v253, 4294901760
      %1914 = vmatmul.mubr.f32.gmra.mrb[0].mxu0 %v1913
      %v1915 = vpop.f32.mrb[0].mxu0
      %v1916 = vadd.f32 %v1783, %v1915
      %v1917 = vpop.f32.mrb[0].mxu0
      %1918 = vmatprep.mubr.f32.mxu0 0.0
      %v1919 = vand.u32 %v256, 4294901760
      %1920 = vmatmul.mubr.f32.gmra.mrb[0].mxu0 %v1919
      %v1921 = vpop.f32.mrb[0].mxu0
      %v1922 = vadd.f32 %v1791, %v1921
      %v1923 = vpop.f32.mrb[0].mxu0
      %1924 = vdwg.mxu0
      %1925 = vmatprep.subr.mxu0 0.0
      %v1926 = vand.u32 %v292, 4294901760
      %1927 = vmatpush1.msra.mxu0 %v1926
      %1928 = vmatprep.subr.mxu0 0.0
      %v1929 = vand.u32 %v293, 4294901760
      %1930 = vmatpush1.msra.mxu0 %v1929
      %1931 = vmatprep.subr.mxu0 0.0
      %v1932 = vand.u32 %v294, 4294901760
      %1933 = vmatpush1.msra.mxu0 %v1932
      %1934 = vmatprep.subr.mxu0 0.0
      %v1935 = vand.u32 %v295, 4294901760
      %1936 = vmatpush1.msra.mxu0 %v1935
      %1937 = vmatprep.subr.mxu0 0.0
      %v1938 = vand.u32 %v296, 4294901760
      %1939 = vmatpush1.msra.mxu0 %v1938
      %1940 = vmatprep.subr.mxu0 0.0
      %v1941 = vand.u32 %v297, 4294901760
      %1942 = vmatpush1.msra.mxu0 %v1941
      %1943 = vmatprep.subr.mxu0 0.0
      %v1944 = vand.u32 %v298, 4294901760
      %1945 = vmatpush1.msra.mxu0 %v1944
      %1946 = vmatprep.subr.mxu0 0.0
      %v1947 = vand.u32 %v299, 4294901760
      %1948 = vmatpush1.msra.mxu0 %v1947
      %1949 = vmatprep.subr.mxu0 0.0
      %v1950 = vand.u32 %v300, 4294901760
      %1951 = vmatpush1.msra.mxu0 %v1950
      %1952 = vmatprep.subr.mxu0 0.0
      %v1953 = vand.u32 %v301, 4294901760
      %1954 = vmatpush1.msra.mxu0 %v1953
      %1955 = vmatprep.subr.mxu0 0.0
      %v1956 = vand.u32 %v302, 4294901760
      %1957 = vmatpush1.msra.mxu0 %v1956
      %1958 = vmatprep.subr.mxu0 0.0
      %v1959 = vand.u32 %v303, 4294901760
      %1960 = vmatpush1.msra.mxu0 %v1959
      %1961 = vmatprep.subr.mxu0 0.0
      %v1962 = vand.u32 %v304, 4294901760
      %1963 = vmatpush1.msra.mxu0 %v1962
      %1964 = vmatprep.subr.mxu0 0.0
      %v1965 = vand.u32 %v305, 4294901760
      %1966 = vmatpush1.msra.mxu0 %v1965
      %1967 = vmatprep.subr.mxu0 0.0
      %v1968 = vand.u32 %v306, 4294901760
      %1969 = vmatpush1.msra.mxu0 %v1968
      %1970 = vmatprep.subr.mxu0 0.0
      %v1971 = vand.u32 %v307, 4294901760
      %1972 = vmatpush1.msra.mxu0 %v1971
      %1973 = vmatprep.subr.mxu0 0.0
      %1974 = vmatpush1.msra.mxu0 0.0
      %1975 = vmatprep.subr.mxu0 0.0
      %1976 = vmatpush1.msra.mxu0 0.0
      %1977 = vmatprep.subr.mxu0 0.0
      %1978 = vmatpush1.msra.mxu0 0.0
      %1979 = vmatprep.subr.mxu0 0.0
      %1980 = vmatpush1.msra.mxu0 0.0
      %1981 = vmatprep.subr.mxu0 0.0
      %1982 = vmatpush1.msra.mxu0 0.0
      %1983 = vmatprep.subr.mxu0 0.0
      %1984 = vmatpush1.msra.mxu0 0.0
      %1985 = vmatprep.subr.mxu0 0.0
      %1986 = vmatpush1.msra.mxu0 0.0
      %1987 = vmatprep.subr.mxu0 0.0
      %1988 = vmatpush1.msra.mxu0 0.0
      %1989 = vmatprep.subr.mxu0 0.0
      %1990 = vmatpush1.msra.mxu0 0.0
      %1991 = vmatprep.subr.mxu0 0.0
      %1992 = vmatpush1.msra.mxu0 0.0
      %1993 = vmatprep.subr.mxu0 0.0
      %1994 = vmatpush1.msra.mxu0 0.0
      %1995 = vmatprep.subr.mxu0 0.0
      %1996 = vmatpush1.msra.mxu0 0.0
      %1997 = vmatprep.subr.mxu0 0.0
      %1998 = vmatpush1.msra.mxu0 0.0
      %1999 = vmatprep.subr.mxu0 0.0
      %2000 = vmatpush1.msra.mxu0 0.0
      %2001 = vmatprep.subr.mxu0 0.0
      %2002 = vmatpush1.msra.mxu0 0.0
      %2003 = vmatprep.subr.mxu0 0.0
      %2004 = vmatpush1.msra.mxu0 0.0
      %2005 = vmatprep.mubr.f32.mxu0 0.0
      %v2006 = vand.u32 %v250, 4294901760
      %2007 = vmatmul.mubr.f32.gmra.mrb[0].mxu0 %v2006
      %v2008 = vpop.f32.mrb[0].mxu0
      %v2009 = vadd.f32 %v1910, %v2008
      %v2010 = vpop.f32.mrb[0].mxu0
      %2011 = vmatprep.mubr.f32.mxu0 0.0
      %v2012 = vand.u32 %v253, 4294901760
      %2013 = vmatmul.mubr.f32.gmra.mrb[0].mxu0 %v2012
      %v2014 = vpop.f32.mrb[0].mxu0
      %v2015 = vadd.f32 %v1916, %v2014
      %v2016 = vpop.f32.mrb[0].mxu0
      %2017 = vmatprep.mubr.f32.mxu0 0.0
      %v2018 = vand.u32 %v256, 4294901760
      %2019 = vmatmul.mubr.f32.gmra.mrb[0].mxu0 %v2018
      %v2020 = vpop.f32.mrb[0].mxu0
      %v2021 = vadd.f32 %v1922, %v2020
      %v2022 = vpop.f32.mrb[0].mxu0
      %2023 = vdwg.mxu0
      %2024 = vst [vmem:[%s239] sm:$0x3] %v2009
      %2025 = vst [vmem:[%s247] sm:$0xff] %v2015
      %2026 = vst [vmem:[%s247 + $0x8] sm:$0x3f] %v2021
      %p2027 = scmp.lt.s32.totalorder %s20, 1
      %s2028 = scalar_select %p2027, %s20, 1
      %p2029 = scmp.lt.s32.totalorder %s21, 0
      %s2030 = scalar_select %p2029, %s21, 0
      %s2031 = sadd.s32 %s2030, %s2028
      %s2032 = smul.addr %s2031, 2
      %s2033 = scalar_lea.vmem %s3, %s2032
      %p2034 = scmp.lt.s32.totalorder %s20, 1
      %s2035 = scalar_select %p2034, %s20, 1
      %p2036 = scmp.lt.s32.totalorder %s21, 0
      %s2037 = scalar_select %p2036, %s21, 0
      %s2038 = smul.addr %s2035, 2
      %s2039 = sadd.s32 %s2037, %s2038
      %s2040 = smul.addr %s2039, 8
      %s2041 = scalar_lea.vmem %s4, %s2040
      // Predicated region
      $region33: #{a_call__.1} parent=31 // pred_check
        %p2042 = pneg %p118
      $region34: #{a_call__.1} parent=31 // pred_check_branch
        %2044 = sbr.rel (%p2042) target = $region36
      $region35: #{a_call__.1} parent=31 // pred_region
        _
      $region36: #{a_call__.1} parent=31 // pred_fallthru
        _
      // Predicated region
      $region37: #{a_call__.1} parent=31 // pred_check
        %p2045 = pneg %p146
      $region38: #{a_call__.1} parent=31 // pred_check_branch
        %2047 = sbr.rel (%p2045) target = $region40
      $region39: #{a_call__.1} parent=31 // pred_region
        _
      $region40: #{a_call__.1} parent=31 // pred_fallthru
        _
    $region32: #{a_call__.1} parent=5 // pred_fallthru
      _
    %p2048 = scmp.le.s32.totalorder 2, %s11
    // Predicated region
    $region41: #{a_call__.1} parent=5 // pred_check
      %p2049 = pneg %p2048
    $region42: #{a_call__.1} parent=5 // pred_check_branch
      %2051 = sbr.rel (%p2049) target = $region44
    $region43: #{a_call__.1} parent=5 // pred_region
      %s2052 = ssub.s32 %s11, 2
      // Predicated region
      $region45: #{a_call__.1} parent=43 // pred_check
        %p2053 = pneg %p124
      $region46: #{a_call__.1} parent=43 // pred_check_branch
        %2055 = sbr.rel (%p2053) target = $region48
      $region47: #{a_call__.1} parent=43 // pred_region
        %p2056 = scmp.lt.s32.totalorder %s22, 1
        %s2057 = scalar_select %p2056, %s22, 1
        %p2058 = scmp.lt.s32.totalorder %s23, 0
        %s2059 = scalar_select %p2058, %s23, 0
        %s2060 = sadd.s32 %s2059, %s2057
        %s2061 = smul.addr %s2060, 2
        %s2062 = scalar_lea.vmem %s3, %s2061
      $region48: #{a_call__.1} parent=43 // pred_fallthru
        _
      // Predicated region
      $region49: #{a_call__.1} parent=43 // pred_check
        %p2063 = pneg %p152
      $region50: #{a_call__.1} parent=43 // pred_check_branch
        %2065 = sbr.rel (%p2063) target = $region52
      $region51: #{a_call__.1} parent=43 // pred_region
        %p2066 = scmp.lt.s32.totalorder %s22, 1
        %s2067 = scalar_select %p2066, %s22, 1
        %p2068 = scmp.lt.s32.totalorder %s23, 0
        %s2069 = scalar_select %p2068, %s23, 0
        %s2070 = smul.addr %s2067, 2
        %s2071 = sadd.s32 %s2069, %s2070
        %s2072 = smul.addr %s2071, 8
        %s2073 = scalar_lea.vmem %s4, %s2072
      $region52: #{a_call__.1} parent=43 // pred_fallthru
        _
    $region44: #{a_call__.1} parent=5 // pred_fallthru
      _
  $region6: #{a_call__.1} parent=0 // loop_footer
    %s15 = sadd.s32 1, %s11
  $region7: #{a_call__.1} parent=0 // loop_footer_branch
    %10 = sbr.rel target = $region3
  $region8: #{a_call__.1} parent=0 // loop_exit
    _

</llo_original>
